<compile_context>
chip_gen: v7x
topology: tpu7x:2x2x1
jax: 0.10.0
libtpu: 0.0.40
codegen_flags: <defaults>
</compile_context>

<pallas_src>
import jax
import jax.numpy as jnp
import numpy as np
from jax import lax
from jax.experimental import pallas as pl
from jax.experimental.pallas import tpu as pltpu

LEAKY_SLOPE = 0.01   # F.leaky_relu default
GN_EPS = 1e-5        # nn.GroupNorm default


# ---------------------------------------------------------------------------
# Fused Pallas kernel: all conv+GN+leaky_relu layers + output conv + sigmoid,
# one sample per grid step, all weights VMEM-resident.
# ---------------------------------------------------------------------------
def _make_fused_kernel(num_layers):
    """refs = (x, [w_tap, gamma, beta] * L, w_fin, out, act_scratch)."""

    def kernel(*refs):
        x_ref = refs[0]
        wfin_ref = refs[1 + 3 * num_layers]
        o_ref = refs[2 + 3 * num_layers]
        act_ref = refs[3 + 3 * num_layers]          # VMEM scratch for tap slicing

        # Per-sample activation, layout (H, C*W): spatial rows x (channel-major
        # flattened width) lanes.  For the input C_in == 1 -> just (H, W).
        y = x_ref[0].astype(jnp.float32)

        for li in range(num_layers):
            wt_ref = refs[1 + 3 * li]               # (K, C_in*W, C_out*OW) bf16
            g_ref = refs[2 + 3 * li]                # (1, C_out*OW) f32
            b_ref = refs[3 + 3 * li]                # (1, C_out*OW) f32
            kk, f_in, f_out = wt_ref.shape
            h = y.shape[0]
            oh = h - kk + 1

            # Stage the layer input in scratch so every conv tap is a plain
            # contiguous row-slice load feeding a 2-D MXU matmul.
            act_ref[:h, :f_in] = y

            # Banded row-tap conv:  acc = sum_di  x[di:di+OH, :] @ W_tap[di]
            acc = jnp.dot(act_ref[0:oh, :f_in],
                          wt_ref[0].astype(jnp.float32),
                          preferred_element_type=jnp.float32)
            for di in range(1, kk):
                acc = acc + jnp.dot(act_ref[di:di + oh, :f_in],
                                    wt_ref[di].astype(jnp.float32),
                                    preferred_element_type=jnp.float32)

            # GroupNorm(num_groups=1, C): per-sample stats over ALL (C, OH, OW)
            # elements == all elements of acc.  Two-pass for numerical stability.
            inv_n = 1.0 / float(oh * f_out)
            mean = jnp.sum(jnp.sum(acc, axis=1, keepdims=True),
                           axis=0, keepdims=True) * inv_n
            cen = acc - mean
            var = jnp.sum(jnp.sum(cen * cen, axis=1, keepdims=True),
                          axis=0, keepdims=True) * inv_n
            y = cen * lax.rsqrt(var + GN_EPS)
            y = y * g_ref[...] + b_ref[...]          # per-channel affine
            y = jnp.maximum(y, LEAKY_SLOPE * y)      # leaky_relu, single VALU op

        # Final conv spans the whole remaining feature map -> one logit/sample.
        z = jnp.sum(jnp.sum(y * wfin_ref[...], axis=1, keepdims=True),
                    axis=0, keepdims=True)           # (1, 1)
        # numerically stable sigmoid
        e = jnp.exp(-jnp.abs(z))
        sig = jnp.where(z >= 0.0, 1.0 / (1.0 + e), e / (1.0 + e))
        # Lane-dense (8, 128) output slab -> unmasked full-vreg store.
        o_ref[...] = jnp.broadcast_to(sig.reshape(1, 1, 1),
                                      o_ref.shape).astype(o_ref.dtype)

    return kernel


def fused_forward(x3, taps, affines, w_fin):
    """x3: (N, H, W) f32 input.  taps[i]: (K, C_in*W, C_out*OW) bf16 banded fold.
    affines[i]: ((1,F), (1,F)) f32 GroupNorm affine.  w_fin: (s, C_last*s) f32.
    Single pallas_call, grid over the batch, all weights resident in VMEM."""
    n, h0, w0 = x3.shape
    num_layers = len(taps)

    args = [x3]
    in_specs = [pl.BlockSpec((1, h0, w0), lambda i: (i, 0, 0))]
    for wt, (g, b) in zip(taps, affines):
        args += [wt, g, b]
        in_specs += [
            pl.BlockSpec(wt.shape, lambda i: (0, 0, 0)),   # constant block -> DMA'd once
            pl.BlockSpec(g.shape, lambda i: (0, 0)),
            pl.BlockSpec(b.shape, lambda i: (0, 0)),
        ]
    args.append(w_fin)
    in_specs.append(pl.BlockSpec(w_fin.shape, lambda i: (0, 0)))

    # Scratch holds the largest per-layer input staged for tap row-slicing.
    sc_rows = h0
    sc_cols = max([w0] + [int(t.shape[2]) for t in taps[:-1]]) if taps else w0

    # ---- VMEM budget guard + compiler hints ----
    param_bytes = sum(int(a.size) * a.dtype.itemsize for a in args[1:])
    io_block_bytes = (h0 * w0 + 8 * 128) * 4 * 2           # double-buffered in/out tiles
    scratch_bytes = sc_rows * max(sc_cols, 128) * 4
    work_set = param_bytes + io_block_bytes + scratch_bytes
    assert work_set < 48 * 1024 * 1024, (
        "working set exceeds a safe VMEM budget; tile F_out / layers over a grid axis")
    vmem_limit = int(max(4 * 1024 * 1024, 4 * work_set))

    flops = 0
    hh = h0
    for wt in taps:
        kk, f_in, f_out = (int(s) for s in wt.shape)
        oh = hh - kk + 1
        flops += 2 * kk * oh * f_in * f_out
        hh = oh
    flops = n * (flops + 2 * int(w_fin.size))
    cost = pl.CostEstimate(
        flops=flops,
        transcendentals=n * (num_layers + 1),
        bytes_accessed=param_bytes + int(x3.size) * 4 + n * 8 * 128 * 4)

    # TODO(synk): for batch >= 8, pack several samples per grid step (M-tile of
    # 128-256 rows) to lift MXU row / sublane utilization; at BATCH=2 the kernel
    # is weight-DMA / launch-latency bound and per-sample steps are optimal.
    return pl.pallas_call(
        _make_fused_kernel(num_layers),
        out_shape=jax.ShapeDtypeStruct((n, 8, 128), jnp.float32),
        grid=(n,),
        in_specs=in_specs,
        out_specs=pl.BlockSpec((1, 8, 128), lambda i: (i, 0, 0)),
        scratch_shapes=[pltpu.VMEM((sc_rows, sc_cols), jnp.float32)],
        compiler_params=pltpu.CompilerParams(
            dimension_semantics=("parallel",),       # v7x: 2 TCs split the batch
            vmem_limit_bytes=vmem_limit),
        cost_estimate=cost,
    )(*args)


# ---------------------------------------------------------------------------
# One-time parameter preprocessing (weights only; no activation data touched)
# ---------------------------------------------------------------------------
def prepare_fused_params(layers, w_out, shape):
    """Fold each KxK conv into K banded row-tap matrices W_tap[di] with
    W_tap[di][ci*W + ow + dj, co*OW + ow] = w[co, ci, di, dj]  (0 <= dj < K),
    so the kernel computes  out = sum_di x_rows[di:di+OH, :] @ W_tap[di].
    Tap weights are stored bf16; GroupNorm affine params (expanded to the
    co*OW+ow column layout) and the final conv stay f32."""
    taps, affines = [], []
    h = w_sp = shape
    for (w, gamma, beta) in layers:
        c_out, c_in, k, _ = w.shape
        oh, ow = h - k + 1, w_sp - k + 1
        wn = np.asarray(w, np.float32)
        wt = np.zeros((k, c_in * w_sp, c_out * ow), np.float32)
        for di in range(k):
            for ci in range(c_in):
                for co in range(c_out):
                    for o in range(ow):
                        wt[di, ci * w_sp + o: ci * w_sp + o + k, co * ow + o] = \
                            wn[co, ci, di, :]
        taps.append(jnp.asarray(wt, jnp.bfloat16))
        gamma_f = jnp.repeat(jnp.asarray(gamma, jnp.float32), ow).reshape(1, -1)
        beta_f = jnp.repeat(jnp.asarray(beta, jnp.float32), ow).reshape(1, -1)
        affines.append((gamma_f, beta_f))
        h, w_sp = oh, ow
    c_last = w_out.shape[1]
    w_fin = jnp.asarray(
        np.transpose(np.asarray(w_out, np.float32)[0], (1, 0, 2))
        .reshape(h, c_last * w_sp), jnp.float32)
    return taps, affines, w_fin


def init_params(key, shape, kernel):
    """Deterministic synthetic parameters with the exact shapes of __init__."""
    layers = []
    in_c, out_c, s = 1, 4, shape
    while s > kernel:
        key, k1, k2, k3 = jax.random.split(key, 4)
        fan_in = in_c * kernel * kernel
        w = jax.random.normal(k1, (out_c, in_c, kernel, kernel), jnp.float32)
        w = w / jnp.sqrt(jnp.float32(fan_in))
        gamma = 1.0 + 0.1 * jax.random.normal(k2, (out_c,), jnp.float32)
        beta = 0.1 * jax.random.normal(k3, (out_c,), jnp.float32)
        layers.append((w, gamma, beta))
        in_c, out_c = out_c, out_c * 2
        s = s - kernel + 1
    key, k1 = jax.random.split(key)
    w_out = jax.random.normal(k1, (1, in_c, s, s), jnp.float32)
    w_out = w_out / jnp.sqrt(jnp.float32(in_c * s * s))
    return layers, w_out


# ---------------------------------------------------------------------------
# Forward pass (mirrors DCGAN_discriminator.forward)
# ---------------------------------------------------------------------------
def dcgan_discriminator(x, taps, affines, w_fin, shape):
    n = x.shape[0]
    # PyTorch: x.reshape(N, 1, shape, -1); with C_in=1 that's the (N, H, W) layout.
    x3 = x.reshape(n, shape, -1).astype(jnp.float32)
    out = fused_forward(x3, taps, affines, w_fin)        # (N, 8, 128) slab
    return out[:, 0, :1]                                 # (N, 1)


# ---------------------------------------------------------------------------
# Pure-JAX reference (correctness check only)
# ---------------------------------------------------------------------------
def reference(x, layers, w_out, shape):
    n = x.shape[0]
    x = x.reshape(n, 1, shape, -1).astype(jnp.float32)
    dn = ("NCHW", "OIHW", "NCHW")
    for (w, gamma, beta) in layers:
        x = lax.conv_general_dilated(x, w, (1, 1), "VALID", dimension_numbers=dn)
        mean = jnp.mean(x, axis=(1, 2, 3), keepdims=True)
        var = jnp.mean((x - mean) ** 2, axis=(1, 2, 3), keepdims=True)
        x = (x - mean) * lax.rsqrt(var + GN_EPS)
        x = x * gamma.reshape(1, -1, 1, 1) + beta.reshape(1, -1, 1, 1)
        x = jnp.where(x >= 0, x, LEAKY_SLOPE * x)
    x = lax.conv_general_dilated(x, w_out, (1, 1), "VALID", dimension_numbers=dn)
    return jax.nn.sigmoid(x).reshape(-1, 1)


if __name__ == "__main__":
    SHAPE, KERNEL, BATCH = 16, 5, 2     # -> 3 conv+GN+lrelu layers, then 4x4 output conv
    key = jax.random.PRNGKey(0)
    kx, kp = jax.random.split(key)
    layers, w_out = init_params(kp, SHAPE, KERNEL)
    x = jax.random.normal(kx, (BATCH, SHAPE, SHAPE), jnp.float32)

    # one-time weight folding: conv -> banded row-tap GEMMs (bf16), GN affine -> per-column
    taps, affines, w_fin = prepare_fused_params(layers, w_out, SHAPE)

    out = dcgan_discriminator(x, taps, affines, w_fin, SHAPE)
    out = jax.block_until_ready(out)
    assert out.shape == (BATCH, 1), out.shape

    # Tight check: reference run with the same bf16-rounded conv weights (isolates
    # kernel correctness from the review-recommended bf16 weight storage).
    layers_bf16 = [(w.astype(jnp.bfloat16).astype(jnp.float32), g, b)
                   for (w, g, b) in layers]
    ref_bf16 = reference(x, layers_bf16, w_out, SHAPE)
    assert jnp.allclose(out, ref_bf16, atol=1e-4, rtol=1e-4), (out, ref_bf16)

    # Loose sanity check against the original full-f32 module semantics.
    ref_f32 = reference(x, layers, w_out, SHAPE)
    assert jnp.allclose(out, ref_f32, atol=5e-2), (out, ref_f32)

    print("KERNEL_OK")
</pallas_src>

<mosaic_0001>
module attributes {stable_mosaic.version = 11 : i64} {
  func.func @kernel(%arg0: i32, %arg1: memref<1x16x16xf32, #tpu.memory_space<vmem>>, %arg2: memref<5x16x48xbf16, #tpu.memory_space<vmem>>, %arg3: memref<1x48xf32, #tpu.memory_space<vmem>>, %arg4: memref<1x48xf32, #tpu.memory_space<vmem>>, %arg5: memref<5x48x64xbf16, #tpu.memory_space<vmem>>, %arg6: memref<1x64xf32, #tpu.memory_space<vmem>>, %arg7: memref<1x64xf32, #tpu.memory_space<vmem>>, %arg8: memref<5x64x64xbf16, #tpu.memory_space<vmem>>, %arg9: memref<1x64xf32, #tpu.memory_space<vmem>>, %arg10: memref<1x64xf32, #tpu.memory_space<vmem>>, %arg11: memref<4x64xf32, #tpu.memory_space<vmem>>, %arg12: memref<1x8x128xf32, #tpu.memory_space<vmem>>, %arg13: memref<16x64xf32, #tpu.memory_space<vmem>>) attributes {dimension_semantics = [#tpu.dimension_semantics<parallel>], iteration_bounds = array<i64: 2>, scalar_prefetch = 0 : i64, scratch_operands = 1 : i64, tpu.core_type = #tpu.core_type<tc>, window_params = [{transform_indices = @transform_0, window_bounds = array<i64: 1, 16, 16>}, {pipeline_mode = #tpu.pipeline_mode<synchronous>, transform_indices = @transform_1, window_bounds = array<i64: 5, 16, 48>}, {pipeline_mode = #tpu.pipeline_mode<synchronous>, transform_indices = @transform_2, window_bounds = array<i64: 1, 48>}, {pipeline_mode = #tpu.pipeline_mode<synchronous>, transform_indices = @transform_3, window_bounds = array<i64: 1, 48>}, {pipeline_mode = #tpu.pipeline_mode<synchronous>, transform_indices = @transform_4, window_bounds = array<i64: 5, 48, 64>}, {pipeline_mode = #tpu.pipeline_mode<synchronous>, transform_indices = @transform_5, window_bounds = array<i64: 1, 64>}, {pipeline_mode = #tpu.pipeline_mode<synchronous>, transform_indices = @transform_6, window_bounds = array<i64: 1, 64>}, {pipeline_mode = #tpu.pipeline_mode<synchronous>, transform_indices = @transform_7, window_bounds = array<i64: 5, 64, 64>}, {pipeline_mode = #tpu.pipeline_mode<synchronous>, transform_indices = @transform_8, window_bounds = array<i64: 1, 64>}, {pipeline_mode = #tpu.pipeline_mode<synchronous>, transform_indices = @transform_9, window_bounds = array<i64: 1, 64>}, {pipeline_mode = #tpu.pipeline_mode<synchronous>, transform_indices = @transform_10, window_bounds = array<i64: 4, 64>}, {transform_indices = @transform_11, window_bounds = array<i64: 1, 8, 128>}]} {
    %c0 = arith.constant 0 : index
    %c0_0 = arith.constant 0 : index
    %c0_1 = arith.constant 0 : index
    %0 = vector.load %arg1[%c0, %c0_0, %c0_1] : memref<1x16x16xf32, #tpu.memory_space<vmem>>, vector<1x16x16xf32>
    %1 = vector.shape_cast %0 : vector<1x16x16xf32> to vector<16x16xf32>
    %c0_2 = arith.constant 0 : index
    %c0_3 = arith.constant 0 : index
    %2 = vector.load %arg13[%c0_2, %c0_3] : memref<16x64xf32, #tpu.memory_space<vmem>>, vector<16x16xf32>
    tpu.vector_store %arg13[%c0_2, %c0_3], %1 {strides = array<i32>} : memref<16x64xf32, #tpu.memory_space<vmem>>, vector<16x16xf32>,
    %c0_4 = arith.constant 0 : index
    %c0_5 = arith.constant 0 : index
    %3 = vector.load %arg13[%c0_4, %c0_5] : memref<16x64xf32, #tpu.memory_space<vmem>>, vector<12x16xf32>
    %c0_6 = arith.constant 0 : index
    %c0_7 = arith.constant 0 : index
    %c0_8 = arith.constant 0 : index
    %4 = vector.load %arg2[%c0_6, %c0_7, %c0_8] : memref<5x16x48xbf16, #tpu.memory_space<vmem>>, vector<1x16x48xbf16>
    %5 = vector.shape_cast %4 : vector<1x16x48xbf16> to vector<16x48xbf16>
    %6 = arith.extf %5 : vector<16x48xbf16> to vector<16x48xf32>
    %cst = arith.constant dense<0.000000e+00> : vector<12x48xf32>
    %7 = tpu.matmul %3, %6, %cst {dimension_numbers = #tpu.dot_dimension_numbers<[1], [0], [0], [1], [0, 0, 1, 1], [], []>} : vector<12x16xf32>, vector<16x48xf32>, vector<12x48xf32> -> vector<12x48xf32>
    %c1 = arith.constant 1 : index
    %c0_9 = arith.constant 0 : index
    %8 = vector.load %arg13[%c1, %c0_9] : memref<16x64xf32, #tpu.memory_space<vmem>>, vector<12x16xf32>
    %c1_10 = arith.constant 1 : index
    %c0_11 = arith.constant 0 : index
    %c0_12 = arith.constant 0 : index
    %9 = vector.load %arg2[%c1_10, %c0_11, %c0_12] : memref<5x16x48xbf16, #tpu.memory_space<vmem>>, vector<1x16x48xbf16>
    %10 = vector.shape_cast %9 : vector<1x16x48xbf16> to vector<16x48xbf16>
    %11 = arith.extf %10 : vector<16x48xbf16> to vector<16x48xf32>
    %cst_13 = arith.constant dense<0.000000e+00> : vector<12x48xf32>
    %12 = tpu.matmul %8, %11, %cst_13 {dimension_numbers = #tpu.dot_dimension_numbers<[1], [0], [0], [1], [0, 0, 1, 1], [], []>} : vector<12x16xf32>, vector<16x48xf32>, vector<12x48xf32> -> vector<12x48xf32>
    %13 = arith.addf %7, %12 : vector<12x48xf32>
    %c2 = arith.constant 2 : index
    %c0_14 = arith.constant 0 : index
    %14 = vector.load %arg13[%c2, %c0_14] : memref<16x64xf32, #tpu.memory_space<vmem>>, vector<12x16xf32>
    %c2_15 = arith.constant 2 : index
    %c0_16 = arith.constant 0 : index
    %c0_17 = arith.constant 0 : index
    %15 = vector.load %arg2[%c2_15, %c0_16, %c0_17] : memref<5x16x48xbf16, #tpu.memory_space<vmem>>, vector<1x16x48xbf16>
    %16 = vector.shape_cast %15 : vector<1x16x48xbf16> to vector<16x48xbf16>
    %17 = arith.extf %16 : vector<16x48xbf16> to vector<16x48xf32>
    %cst_18 = arith.constant dense<0.000000e+00> : vector<12x48xf32>
    %18 = tpu.matmul %14, %17, %cst_18 {dimension_numbers = #tpu.dot_dimension_numbers<[1], [0], [0], [1], [0, 0, 1, 1], [], []>} : vector<12x16xf32>, vector<16x48xf32>, vector<12x48xf32> -> vector<12x48xf32>
    %19 = arith.addf %13, %18 : vector<12x48xf32>
    %c3 = arith.constant 3 : index
    %c0_19 = arith.constant 0 : index
    %20 = vector.load %arg13[%c3, %c0_19] : memref<16x64xf32, #tpu.memory_space<vmem>>, vector<12x16xf32>
    %c3_20 = arith.constant 3 : index
    %c0_21 = arith.constant 0 : index
    %c0_22 = arith.constant 0 : index
    %21 = vector.load %arg2[%c3_20, %c0_21, %c0_22] : memref<5x16x48xbf16, #tpu.memory_space<vmem>>, vector<1x16x48xbf16>
    %22 = vector.shape_cast %21 : vector<1x16x48xbf16> to vector<16x48xbf16>
    %23 = arith.extf %22 : vector<16x48xbf16> to vector<16x48xf32>
    %cst_23 = arith.constant dense<0.000000e+00> : vector<12x48xf32>
    %24 = tpu.matmul %20, %23, %cst_23 {dimension_numbers = #tpu.dot_dimension_numbers<[1], [0], [0], [1], [0, 0, 1, 1], [], []>} : vector<12x16xf32>, vector<16x48xf32>, vector<12x48xf32> -> vector<12x48xf32>
    %25 = arith.addf %19, %24 : vector<12x48xf32>
    %c4 = arith.constant 4 : index
    %c0_24 = arith.constant 0 : index
    %26 = vector.load %arg13[%c4, %c0_24] : memref<16x64xf32, #tpu.memory_space<vmem>>, vector<12x16xf32>
    %c4_25 = arith.constant 4 : index
    %c0_26 = arith.constant 0 : index
    %c0_27 = arith.constant 0 : index
    %27 = vector.load %arg2[%c4_25, %c0_26, %c0_27] : memref<5x16x48xbf16, #tpu.memory_space<vmem>>, vector<1x16x48xbf16>
    %28 = vector.shape_cast %27 : vector<1x16x48xbf16> to vector<16x48xbf16>
    %29 = arith.extf %28 : vector<16x48xbf16> to vector<16x48xf32>
    %cst_28 = arith.constant dense<0.000000e+00> : vector<12x48xf32>
    %30 = tpu.matmul %26, %29, %cst_28 {dimension_numbers = #tpu.dot_dimension_numbers<[1], [0], [0], [1], [0, 0, 1, 1], [], []>} : vector<12x16xf32>, vector<16x48xf32>, vector<12x48xf32> -> vector<12x48xf32>
    %31 = arith.addf %25, %30 : vector<12x48xf32>
    %cst_29 = arith.constant dense<0.000000e+00> : vector<12xf32>
    %32 = vector.multi_reduction <add>, %31, %cst_29 [1] : vector<12x48xf32> to vector<12xf32>
    %33 = vector.shape_cast %32 : vector<12xf32> to vector<12x1xf32>
    %cst_30 = arith.constant dense<0.000000e+00> : vector<1xf32>
    %34 = vector.multi_reduction <add>, %33, %cst_30 [0] : vector<12x1xf32> to vector<1xf32>
    %35 = vector.shape_cast %34 : vector<1xf32> to vector<1x1xf32>
    %cst_31 = arith.constant 0.00173611112 : f32
    %36 = vector.broadcast %cst_31 : f32 to vector<1x1xf32>
    %37 = arith.mulf %35, %36 : vector<1x1xf32>
    %38 = vector.broadcast %37 : vector<1x1xf32> to vector<12x48xf32>
    %39 = arith.subf %31, %38 : vector<12x48xf32>
    %40 = arith.mulf %39, %39 : vector<12x48xf32>
    %cst_32 = arith.constant dense<0.000000e+00> : vector<12xf32>
    %41 = vector.multi_reduction <add>, %40, %cst_32 [1] : vector<12x48xf32> to vector<12xf32>
    %42 = vector.shape_cast %41 : vector<12xf32> to vector<12x1xf32>
    %cst_33 = arith.constant dense<0.000000e+00> : vector<1xf32>
    %43 = vector.multi_reduction <add>, %42, %cst_33 [0] : vector<12x1xf32> to vector<1xf32>
    %44 = vector.shape_cast %43 : vector<1xf32> to vector<1x1xf32>
    %cst_34 = arith.constant 0.00173611112 : f32
    %45 = vector.broadcast %cst_34 : f32 to vector<1x1xf32>
    %46 = arith.mulf %44, %45 : vector<1x1xf32>
    %cst_35 = arith.constant 9.99999974E-6 : f32
    %47 = vector.broadcast %cst_35 : f32 to vector<1x1xf32>
    %48 = arith.addf %46, %47 : vector<1x1xf32>
    %49 = math.rsqrt %48 : vector<1x1xf32>
    %50 = vector.broadcast %49 : vector<1x1xf32> to vector<12x48xf32>
    %51 = arith.mulf %39, %50 : vector<12x48xf32>
    %c0_36 = arith.constant 0 : index
    %c0_37 = arith.constant 0 : index
    %52 = vector.load %arg3[%c0_36, %c0_37] : memref<1x48xf32, #tpu.memory_space<vmem>>, vector<1x48xf32>
    %53 = vector.broadcast %52 : vector<1x48xf32> to vector<12x48xf32>
    %54 = arith.mulf %51, %53 : vector<12x48xf32>
    %c0_38 = arith.constant 0 : index
    %c0_39 = arith.constant 0 : index
    %55 = vector.load %arg4[%c0_38, %c0_39] : memref<1x48xf32, #tpu.memory_space<vmem>>, vector<1x48xf32>
    %56 = vector.broadcast %55 : vector<1x48xf32> to vector<12x48xf32>
    %57 = arith.addf %54, %56 : vector<12x48xf32>
    %cst_40 = arith.constant 0.00999999977 : f32
    %58 = vector.broadcast %cst_40 : f32 to vector<12x48xf32>
    %59 = arith.mulf %58, %57 : vector<12x48xf32>
    %60 = arith.maximumf %57, %59 : vector<12x48xf32>
    %c0_41 = arith.constant 0 : index
    %c0_42 = arith.constant 0 : index
    %61 = vector.load %arg13[%c0_41, %c0_42] : memref<16x64xf32, #tpu.memory_space<vmem>>, vector<12x48xf32>
    tpu.vector_store %arg13[%c0_41, %c0_42], %60 {strides = array<i32>} : memref<16x64xf32, #tpu.memory_space<vmem>>, vector<12x48xf32>,
    %c0_43 = arith.constant 0 : index
    %c0_44 = arith.constant 0 : index
    %62 = vector.load %arg13[%c0_43, %c0_44] : memref<16x64xf32, #tpu.memory_space<vmem>>, vector<8x48xf32>
    %c0_45 = arith.constant 0 : index
    %c0_46 = arith.constant 0 : index
    %c0_47 = arith.constant 0 : index
    %63 = vector.load %arg5[%c0_45, %c0_46, %c0_47] : memref<5x48x64xbf16, #tpu.memory_space<vmem>>, vector<1x48x64xbf16>
    %64 = vector.shape_cast %63 : vector<1x48x64xbf16> to vector<48x64xbf16>
    %65 = arith.extf %64 : vector<48x64xbf16> to vector<48x64xf32>
    %cst_48 = arith.constant dense<0.000000e+00> : vector<8x64xf32>
    %66 = tpu.matmul %62, %65, %cst_48 {dimension_numbers = #tpu.dot_dimension_numbers<[1], [0], [0], [1], [0, 0, 1, 1], [], []>} : vector<8x48xf32>, vector<48x64xf32>, vector<8x64xf32> -> vector<8x64xf32>
    %c1_49 = arith.constant 1 : index
    %c0_50 = arith.constant 0 : index
    %67 = vector.load %arg13[%c1_49, %c0_50] : memref<16x64xf32, #tpu.memory_space<vmem>>, vector<8x48xf32>
    %c1_51 = arith.constant 1 : index
    %c0_52 = arith.constant 0 : index
    %c0_53 = arith.constant 0 : index
    %68 = vector.load %arg5[%c1_51, %c0_52, %c0_53] : memref<5x48x64xbf16, #tpu.memory_space<vmem>>, vector<1x48x64xbf16>
    %69 = vector.shape_cast %68 : vector<1x48x64xbf16> to vector<48x64xbf16>
    %70 = arith.extf %69 : vector<48x64xbf16> to vector<48x64xf32>
    %cst_54 = arith.constant dense<0.000000e+00> : vector<8x64xf32>
    %71 = tpu.matmul %67, %70, %cst_54 {dimension_numbers = #tpu.dot_dimension_numbers<[1], [0], [0], [1], [0, 0, 1, 1], [], []>} : vector<8x48xf32>, vector<48x64xf32>, vector<8x64xf32> -> vector<8x64xf32>
    %72 = arith.addf %66, %71 : vector<8x64xf32>
    %c2_55 = arith.constant 2 : index
    %c0_56 = arith.constant 0 : index
    %73 = vector.load %arg13[%c2_55, %c0_56] : memref<16x64xf32, #tpu.memory_space<vmem>>, vector<8x48xf32>
    %c2_57 = arith.constant 2 : index
    %c0_58 = arith.constant 0 : index
    %c0_59 = arith.constant 0 : index
    %74 = vector.load %arg5[%c2_57, %c0_58, %c0_59] : memref<5x48x64xbf16, #tpu.memory_space<vmem>>, vector<1x48x64xbf16>
    %75 = vector.shape_cast %74 : vector<1x48x64xbf16> to vector<48x64xbf16>
    %76 = arith.extf %75 : vector<48x64xbf16> to vector<48x64xf32>
    %cst_60 = arith.constant dense<0.000000e+00> : vector<8x64xf32>
    %77 = tpu.matmul %73, %76, %cst_60 {dimension_numbers = #tpu.dot_dimension_numbers<[1], [0], [0], [1], [0, 0, 1, 1], [], []>} : vector<8x48xf32>, vector<48x64xf32>, vector<8x64xf32> -> vector<8x64xf32>
    %78 = arith.addf %72, %77 : vector<8x64xf32>
    %c3_61 = arith.constant 3 : index
    %c0_62 = arith.constant 0 : index
    %79 = vector.load %arg13[%c3_61, %c0_62] : memref<16x64xf32, #tpu.memory_space<vmem>>, vector<8x48xf32>
    %c3_63 = arith.constant 3 : index
    %c0_64 = arith.constant 0 : index
    %c0_65 = arith.constant 0 : index
    %80 = vector.load %arg5[%c3_63, %c0_64, %c0_65] : memref<5x48x64xbf16, #tpu.memory_space<vmem>>, vector<1x48x64xbf16>
    %81 = vector.shape_cast %80 : vector<1x48x64xbf16> to vector<48x64xbf16>
    %82 = arith.extf %81 : vector<48x64xbf16> to vector<48x64xf32>
    %cst_66 = arith.constant dense<0.000000e+00> : vector<8x64xf32>
    %83 = tpu.matmul %79, %82, %cst_66 {dimension_numbers = #tpu.dot_dimension_numbers<[1], [0], [0], [1], [0, 0, 1, 1], [], []>} : vector<8x48xf32>, vector<48x64xf32>, vector<8x64xf32> -> vector<8x64xf32>
    %84 = arith.addf %78, %83 : vector<8x64xf32>
    %c4_67 = arith.constant 4 : index
    %c0_68 = arith.constant 0 : index
    %85 = vector.load %arg13[%c4_67, %c0_68] : memref<16x64xf32, #tpu.memory_space<vmem>>, vector<8x48xf32>
    %c4_69 = arith.constant 4 : index
    %c0_70 = arith.constant 0 : index
    %c0_71 = arith.constant 0 : index
    %86 = vector.load %arg5[%c4_69, %c0_70, %c0_71] : memref<5x48x64xbf16, #tpu.memory_space<vmem>>, vector<1x48x64xbf16>
    %87 = vector.shape_cast %86 : vector<1x48x64xbf16> to vector<48x64xbf16>
    %88 = arith.extf %87 : vector<48x64xbf16> to vector<48x64xf32>
    %cst_72 = arith.constant dense<0.000000e+00> : vector<8x64xf32>
    %89 = tpu.matmul %85, %88, %cst_72 {dimension_numbers = #tpu.dot_dimension_numbers<[1], [0], [0], [1], [0, 0, 1, 1], [], []>} : vector<8x48xf32>, vector<48x64xf32>, vector<8x64xf32> -> vector<8x64xf32>
    %90 = arith.addf %84, %89 : vector<8x64xf32>
    %cst_73 = arith.constant dense<0.000000e+00> : vector<8xf32>
    %91 = vector.multi_reduction <add>, %90, %cst_73 [1] : vector<8x64xf32> to vector<8xf32>
    %92 = vector.shape_cast %91 : vector<8xf32> to vector<8x1xf32>
    %cst_74 = arith.constant dense<0.000000e+00> : vector<1xf32>
    %93 = vector.multi_reduction <add>, %92, %cst_74 [0] : vector<8x1xf32> to vector<1xf32>
    %94 = vector.shape_cast %93 : vector<1xf32> to vector<1x1xf32>
    %cst_75 = arith.constant 0.001953125 : f32
    %95 = vector.broadcast %cst_75 : f32 to vector<1x1xf32>
    %96 = arith.mulf %94, %95 : vector<1x1xf32>
    %97 = vector.broadcast %96 : vector<1x1xf32> to vector<8x64xf32>
    %98 = arith.subf %90, %97 : vector<8x64xf32>
    %99 = arith.mulf %98, %98 : vector<8x64xf32>
    %cst_76 = arith.constant dense<0.000000e+00> : vector<8xf32>
    %100 = vector.multi_reduction <add>, %99, %cst_76 [1] : vector<8x64xf32> to vector<8xf32>
    %101 = vector.shape_cast %100 : vector<8xf32> to vector<8x1xf32>
    %cst_77 = arith.constant dense<0.000000e+00> : vector<1xf32>
    %102 = vector.multi_reduction <add>, %101, %cst_77 [0] : vector<8x1xf32> to vector<1xf32>
    %103 = vector.shape_cast %102 : vector<1xf32> to vector<1x1xf32>
    %cst_78 = arith.constant 0.001953125 : f32
    %104 = vector.broadcast %cst_78 : f32 to vector<1x1xf32>
    %105 = arith.mulf %103, %104 : vector<1x1xf32>
    %cst_79 = arith.constant 9.99999974E-6 : f32
    %106 = vector.broadcast %cst_79 : f32 to vector<1x1xf32>
    %107 = arith.addf %105, %106 : vector<1x1xf32>
    %108 = math.rsqrt %107 : vector<1x1xf32>
    %109 = vector.broadcast %108 : vector<1x1xf32> to vector<8x64xf32>
    %110 = arith.mulf %98, %109 : vector<8x64xf32>
    %c0_80 = arith.constant 0 : index
    %c0_81 = arith.constant 0 : index
    %111 = vector.load %arg6[%c0_80, %c0_81] : memref<1x64xf32, #tpu.memory_space<vmem>>, vector<1x64xf32>
    %112 = vector.broadcast %111 : vector<1x64xf32> to vector<8x64xf32>
    %113 = arith.mulf %110, %112 : vector<8x64xf32>
    %c0_82 = arith.constant 0 : index
    %c0_83 = arith.constant 0 : index
    %114 = vector.load %arg7[%c0_82, %c0_83] : memref<1x64xf32, #tpu.memory_space<vmem>>, vector<1x64xf32>
    %115 = vector.broadcast %114 : vector<1x64xf32> to vector<8x64xf32>
    %116 = arith.addf %113, %115 : vector<8x64xf32>
    %cst_84 = arith.constant 0.00999999977 : f32
    %117 = vector.broadcast %cst_84 : f32 to vector<8x64xf32>
    %118 = arith.mulf %117, %116 : vector<8x64xf32>
    %119 = arith.maximumf %116, %118 : vector<8x64xf32>
    %c0_85 = arith.constant 0 : index
    %c0_86 = arith.constant 0 : index
    %120 = vector.load %arg13[%c0_85, %c0_86] : memref<16x64xf32, #tpu.memory_space<vmem>>, vector<8x64xf32>
    tpu.vector_store %arg13[%c0_85, %c0_86], %119 {strides = array<i32>} : memref<16x64xf32, #tpu.memory_space<vmem>>, vector<8x64xf32>,
    %c0_87 = arith.constant 0 : index
    %c0_88 = arith.constant 0 : index
    %121 = vector.load %arg13[%c0_87, %c0_88] : memref<16x64xf32, #tpu.memory_space<vmem>>, vector<4x64xf32>
    %c0_89 = arith.constant 0 : index
    %c0_90 = arith.constant 0 : index
    %c0_91 = arith.constant 0 : index
    %122 = vector.load %arg8[%c0_89, %c0_90, %c0_91] : memref<5x64x64xbf16, #tpu.memory_space<vmem>>, vector<1x64x64xbf16>
    %123 = vector.shape_cast %122 : vector<1x64x64xbf16> to vector<64x64xbf16>
    %124 = arith.extf %123 : vector<64x64xbf16> to vector<64x64xf32>
    %cst_92 = arith.constant dense<0.000000e+00> : vector<4x64xf32>
    %125 = tpu.matmul %121, %124, %cst_92 {dimension_numbers = #tpu.dot_dimension_numbers<[1], [0], [0], [1], [0, 0, 1, 1], [], []>} : vector<4x64xf32>, vector<64x64xf32>, vector<4x64xf32> -> vector<4x64xf32>
    %c1_93 = arith.constant 1 : index
    %c0_94 = arith.constant 0 : index
    %126 = vector.load %arg13[%c1_93, %c0_94] : memref<16x64xf32, #tpu.memory_space<vmem>>, vector<4x64xf32>
    %c1_95 = arith.constant 1 : index
    %c0_96 = arith.constant 0 : index
    %c0_97 = arith.constant 0 : index
    %127 = vector.load %arg8[%c1_95, %c0_96, %c0_97] : memref<5x64x64xbf16, #tpu.memory_space<vmem>>, vector<1x64x64xbf16>
    %128 = vector.shape_cast %127 : vector<1x64x64xbf16> to vector<64x64xbf16>
    %129 = arith.extf %128 : vector<64x64xbf16> to vector<64x64xf32>
    %cst_98 = arith.constant dense<0.000000e+00> : vector<4x64xf32>
    %130 = tpu.matmul %126, %129, %cst_98 {dimension_numbers = #tpu.dot_dimension_numbers<[1], [0], [0], [1], [0, 0, 1, 1], [], []>} : vector<4x64xf32>, vector<64x64xf32>, vector<4x64xf32> -> vector<4x64xf32>
    %131 = arith.addf %125, %130 : vector<4x64xf32>
    %c2_99 = arith.constant 2 : index
    %c0_100 = arith.constant 0 : index
    %132 = vector.load %arg13[%c2_99, %c0_100] : memref<16x64xf32, #tpu.memory_space<vmem>>, vector<4x64xf32>
    %c2_101 = arith.constant 2 : index
    %c0_102 = arith.constant 0 : index
    %c0_103 = arith.constant 0 : index
    %133 = vector.load %arg8[%c2_101, %c0_102, %c0_103] : memref<5x64x64xbf16, #tpu.memory_space<vmem>>, vector<1x64x64xbf16>
    %134 = vector.shape_cast %133 : vector<1x64x64xbf16> to vector<64x64xbf16>
    %135 = arith.extf %134 : vector<64x64xbf16> to vector<64x64xf32>
    %cst_104 = arith.constant dense<0.000000e+00> : vector<4x64xf32>
    %136 = tpu.matmul %132, %135, %cst_104 {dimension_numbers = #tpu.dot_dimension_numbers<[1], [0], [0], [1], [0, 0, 1, 1], [], []>} : vector<4x64xf32>, vector<64x64xf32>, vector<4x64xf32> -> vector<4x64xf32>
    %137 = arith.addf %131, %136 : vector<4x64xf32>
    %c3_105 = arith.constant 3 : index
    %c0_106 = arith.constant 0 : index
    %138 = vector.load %arg13[%c3_105, %c0_106] : memref<16x64xf32, #tpu.memory_space<vmem>>, vector<4x64xf32>
    %c3_107 = arith.constant 3 : index
    %c0_108 = arith.constant 0 : index
    %c0_109 = arith.constant 0 : index
    %139 = vector.load %arg8[%c3_107, %c0_108, %c0_109] : memref<5x64x64xbf16, #tpu.memory_space<vmem>>, vector<1x64x64xbf16>
    %140 = vector.shape_cast %139 : vector<1x64x64xbf16> to vector<64x64xbf16>
    %141 = arith.extf %140 : vector<64x64xbf16> to vector<64x64xf32>
    %cst_110 = arith.constant dense<0.000000e+00> : vector<4x64xf32>
    %142 = tpu.matmul %138, %141, %cst_110 {dimension_numbers = #tpu.dot_dimension_numbers<[1], [0], [0], [1], [0, 0, 1, 1], [], []>} : vector<4x64xf32>, vector<64x64xf32>, vector<4x64xf32> -> vector<4x64xf32>
    %143 = arith.addf %137, %142 : vector<4x64xf32>
    %c4_111 = arith.constant 4 : index
    %c0_112 = arith.constant 0 : index
    %144 = vector.load %arg13[%c4_111, %c0_112] : memref<16x64xf32, #tpu.memory_space<vmem>>, vector<4x64xf32>
    %c4_113 = arith.constant 4 : index
    %c0_114 = arith.constant 0 : index
    %c0_115 = arith.constant 0 : index
    %145 = vector.load %arg8[%c4_113, %c0_114, %c0_115] : memref<5x64x64xbf16, #tpu.memory_space<vmem>>, vector<1x64x64xbf16>
    %146 = vector.shape_cast %145 : vector<1x64x64xbf16> to vector<64x64xbf16>
    %147 = arith.extf %146 : vector<64x64xbf16> to vector<64x64xf32>
    %cst_116 = arith.constant dense<0.000000e+00> : vector<4x64xf32>
    %148 = tpu.matmul %144, %147, %cst_116 {dimension_numbers = #tpu.dot_dimension_numbers<[1], [0], [0], [1], [0, 0, 1, 1], [], []>} : vector<4x64xf32>, vector<64x64xf32>, vector<4x64xf32> -> vector<4x64xf32>
    %149 = arith.addf %143, %148 : vector<4x64xf32>
    %cst_117 = arith.constant dense<0.000000e+00> : vector<4xf32>
    %150 = vector.multi_reduction <add>, %149, %cst_117 [1] : vector<4x64xf32> to vector<4xf32>
    %151 = vector.shape_cast %150 : vector<4xf32> to vector<4x1xf32>
    %cst_118 = arith.constant dense<0.000000e+00> : vector<1xf32>
    %152 = vector.multi_reduction <add>, %151, %cst_118 [0] : vector<4x1xf32> to vector<1xf32>
    %153 = vector.shape_cast %152 : vector<1xf32> to vector<1x1xf32>
    %cst_119 = arith.constant 3.906250e-03 : f32
    %154 = vector.broadcast %cst_119 : f32 to vector<1x1xf32>
    %155 = arith.mulf %153, %154 : vector<1x1xf32>
    %156 = vector.broadcast %155 : vector<1x1xf32> to vector<4x64xf32>
    %157 = arith.subf %149, %156 : vector<4x64xf32>
    %158 = arith.mulf %157, %157 : vector<4x64xf32>
    %cst_120 = arith.constant dense<0.000000e+00> : vector<4xf32>
    %159 = vector.multi_reduction <add>, %158, %cst_120 [1] : vector<4x64xf32> to vector<4xf32>
    %160 = vector.shape_cast %159 : vector<4xf32> to vector<4x1xf32>
    %cst_121 = arith.constant dense<0.000000e+00> : vector<1xf32>
    %161 = vector.multi_reduction <add>, %160, %cst_121 [0] : vector<4x1xf32> to vector<1xf32>
    %162 = vector.shape_cast %161 : vector<1xf32> to vector<1x1xf32>
    %cst_122 = arith.constant 3.906250e-03 : f32
    %163 = vector.broadcast %cst_122 : f32 to vector<1x1xf32>
    %164 = arith.mulf %162, %163 : vector<1x1xf32>
    %cst_123 = arith.constant 9.99999974E-6 : f32
    %165 = vector.broadcast %cst_123 : f32 to vector<1x1xf32>
    %166 = arith.addf %164, %165 : vector<1x1xf32>
    %167 = math.rsqrt %166 : vector<1x1xf32>
    %168 = vector.broadcast %167 : vector<1x1xf32> to vector<4x64xf32>
    %169 = arith.mulf %157, %168 : vector<4x64xf32>
    %c0_124 = arith.constant 0 : index
    %c0_125 = arith.constant 0 : index
    %170 = vector.load %arg9[%c0_124, %c0_125] : memref<1x64xf32, #tpu.memory_space<vmem>>, vector<1x64xf32>
    %171 = vector.broadcast %170 : vector<1x64xf32> to vector<4x64xf32>
    %172 = arith.mulf %169, %171 : vector<4x64xf32>
    %c0_126 = arith.constant 0 : index
    %c0_127 = arith.constant 0 : index
    %173 = vector.load %arg10[%c0_126, %c0_127] : memref<1x64xf32, #tpu.memory_space<vmem>>, vector<1x64xf32>
    %174 = vector.broadcast %173 : vector<1x64xf32> to vector<4x64xf32>
    %175 = arith.addf %172, %174 : vector<4x64xf32>
    %cst_128 = arith.constant 0.00999999977 : f32
    %176 = vector.broadcast %cst_128 : f32 to vector<4x64xf32>
    %177 = arith.mulf %176, %175 : vector<4x64xf32>
    %178 = arith.maximumf %175, %177 : vector<4x64xf32>
    %c0_129 = arith.constant 0 : index
    %c0_130 = arith.constant 0 : index
    %179 = vector.load %arg11[%c0_129, %c0_130] : memref<4x64xf32, #tpu.memory_space<vmem>>, vector<4x64xf32>
    %180 = arith.mulf %178, %179 : vector<4x64xf32>
    %cst_131 = arith.constant dense<0.000000e+00> : vector<4xf32>
    %181 = vector.multi_reduction <add>, %180, %cst_131 [1] : vector<4x64xf32> to vector<4xf32>
    %182 = vector.shape_cast %181 : vector<4xf32> to vector<4x1xf32>
    %cst_132 = arith.constant dense<0.000000e+00> : vector<1xf32>
    %183 = vector.multi_reduction <add>, %182, %cst_132 [0] : vector<4x1xf32> to vector<1xf32>
    %184 = vector.shape_cast %183 : vector<1xf32> to vector<1x1xf32>
    %185 = math.absf %184 : vector<1x1xf32>
    %cst_133 = arith.constant 0.000000e+00 : f32
    %186 = vector.broadcast %cst_133 : f32 to vector<1x1xf32>
    %187 = arith.subf %186, %185 : vector<1x1xf32>
    %188 = math.exp %187 : vector<1x1xf32>
    %cst_134 = arith.constant 0.000000e+00 : f32
    %189 = vector.broadcast %cst_134 : f32 to vector<1x1xf32>
    %190 = arith.cmpf oge, %184, %189 : vector<1x1xf32>
    %cst_135 = arith.constant 1.000000e+00 : f32
    %191 = vector.broadcast %cst_135 : f32 to vector<1x1xf32>
    %192 = arith.addf %191, %188 : vector<1x1xf32>
    %cst_136 = arith.constant 1.000000e+00 : f32
    %193 = vector.broadcast %cst_136 : f32 to vector<1x1xf32>
    %194 = arith.divf %193, %192 : vector<1x1xf32>
    %cst_137 = arith.constant 1.000000e+00 : f32
    %195 = vector.broadcast %cst_137 : f32 to vector<1x1xf32>
    %196 = arith.addf %195, %188 : vector<1x1xf32>
    %197 = arith.divf %188, %196 : vector<1x1xf32>
    %198 = arith.select %190, %194, %197 : vector<1x1xi1>, vector<1x1xf32>
    %199 = vector.shape_cast %198 : vector<1x1xf32> to vector<1x1x1xf32>
    %200 = vector.shape_cast %199 : vector<1x1x1xf32> to vector<1x1x1xf32>
    %201 = vector.broadcast %200 : vector<1x1x1xf32> to vector<1x8x128xf32>
    %c0_138 = arith.constant 0 : index
    %c0_139 = arith.constant 0 : index
    %c0_140 = arith.constant 0 : index
    %202 = vector.load %arg12[%c0_138, %c0_139, %c0_140] : memref<1x8x128xf32, #tpu.memory_space<vmem>>, vector<1x8x128xf32>
    tpu.vector_store %arg12[%c0_138, %c0_139, %c0_140], %201 {strides = array<i32>} : memref<1x8x128xf32, #tpu.memory_space<vmem>>, vector<1x8x128xf32>,
    return
  }
  func.func @transform_0(%arg0: i32) -> (i32, i32, i32) {
    %c0_i32 = arith.constant 0 : i32
    %c0_i32_0 = arith.constant 0 : i32
    %c0_i32_1 = arith.constant 0 : i32
    return %arg0, %c0_i32, %c0_i32_0 : i32, i32, i32
  }
  func.func @transform_1(%arg0: i32) -> (i32, i32, i32) {
    %c0_i32 = arith.constant 0 : i32
    %c0_i32_0 = arith.constant 0 : i32
    %c0_i32_1 = arith.constant 0 : i32
    %c0_i32_2 = arith.constant 0 : i32
    return %c0_i32, %c0_i32_0, %c0_i32_1 : i32, i32, i32
  }
  func.func @transform_2(%arg0: i32) -> (i32, i32) {
    %c0_i32 = arith.constant 0 : i32
    %c0_i32_0 = arith.constant 0 : i32
    %c0_i32_1 = arith.constant 0 : i32
    return %c0_i32, %c0_i32_0 : i32, i32
  }
  func.func @transform_3(%arg0: i32) -> (i32, i32) {
    %c0_i32 = arith.constant 0 : i32
    %c0_i32_0 = arith.constant 0 : i32
    %c0_i32_1 = arith.constant 0 : i32
    return %c0_i32, %c0_i32_0 : i32, i32
  }
  func.func @transform_4(%arg0: i32) -> (i32, i32, i32) {
    %c0_i32 = arith.constant 0 : i32
    %c0_i32_0 = arith.constant 0 : i32
    %c0_i32_1 = arith.constant 0 : i32
    %c0_i32_2 = arith.constant 0 : i32
    return %c0_i32, %c0_i32_0, %c0_i32_1 : i32, i32, i32
  }
  func.func @transform_5(%arg0: i32) -> (i32, i32) {
    %c0_i32 = arith.constant 0 : i32
    %c0_i32_0 = arith.constant 0 : i32
    %c0_i32_1 = arith.constant 0 : i32
    return %c0_i32, %c0_i32_0 : i32, i32
  }
  func.func @transform_6(%arg0: i32) -> (i32, i32) {
    %c0_i32 = arith.constant 0 : i32
    %c0_i32_0 = arith.constant 0 : i32
    %c0_i32_1 = arith.constant 0 : i32
    return %c0_i32, %c0_i32_0 : i32, i32
  }
  func.func @transform_7(%arg0: i32) -> (i32, i32, i32) {
    %c0_i32 = arith.constant 0 : i32
    %c0_i32_0 = arith.constant 0 : i32
    %c0_i32_1 = arith.constant 0 : i32
    %c0_i32_2 = arith.constant 0 : i32
    return %c0_i32, %c0_i32_0, %c0_i32_1 : i32, i32, i32
  }
  func.func @transform_8(%arg0: i32) -> (i32, i32) {
    %c0_i32 = arith.constant 0 : i32
    %c0_i32_0 = arith.constant 0 : i32
    %c0_i32_1 = arith.constant 0 : i32
    return %c0_i32, %c0_i32_0 : i32, i32
  }
  func.func @transform_9(%arg0: i32) -> (i32, i32) {
    %c0_i32 = arith.constant 0 : i32
    %c0_i32_0 = arith.constant 0 : i32
    %c0_i32_1 = arith.constant 0 : i32
    return %c0_i32, %c0_i32_0 : i32, i32
  }
  func.func @transform_10(%arg0: i32) -> (i32, i32) {
    %c0_i32 = arith.constant 0 : i32
    %c0_i32_0 = arith.constant 0 : i32
    %c0_i32_1 = arith.constant 0 : i32
    return %c0_i32, %c0_i32_0 : i32, i32
  }
  func.func @transform_11(%arg0: i32) -> (i32, i32, i32) {
    %c0_i32 = arith.constant 0 : i32
    %c0_i32_0 = arith.constant 0 : i32
    %c0_i32_1 = arith.constant 0 : i32
    return %arg0, %c0_i32, %c0_i32_0 : i32, i32, i32
  }
}

</mosaic_0001>

<llo_original>
// kernel: tpu_custom_call.1
$region0: #{tpu_custom_call.1}
  #allocation0 [shape = 'u32[]', space=smem, size = 0x4, offset = 0x4, fixed_abs, tag = 'smem constant byte address 0x4 - core index']
  #allocation1 [shape = 'u32[144,128]{1,0:T(1,128)}', space=vmem, size = 0x12000, scoped, tag = 'internal scratch']
  #allocation2 [shape = 'f32[16,64]{1,0:T(8,128)}', space=vmem, size = 0x2000, scoped, tag = 'scratch operand']
  %s0 = inlined_call_operand.hbm [shape: f32[2,16,16], index: 0, kind: input, shape index: {}]
  %s1 = inlined_call_operand.hbm [shape: bf16[5,16,48], index: 1, kind: input, shape index: {}]
  %s2 = inlined_call_operand.vmem [shape: f32[1,48], index: 2, kind: input, shape index: {}]
  %s3 = inlined_call_operand.vmem [shape: f32[1,48], index: 3, kind: input, shape index: {}]
  %s4 = inlined_call_operand.hbm [shape: bf16[5,48,64], index: 4, kind: input, shape index: {}]
  %s5 = inlined_call_operand.vmem [shape: f32[1,64], index: 5, kind: input, shape index: {}]
  %s6 = inlined_call_operand.vmem [shape: f32[1,64], index: 6, kind: input, shape index: {}]
  %s7 = inlined_call_operand.hbm [shape: bf16[5,64,64], index: 7, kind: input, shape index: {}]
  %s8 = inlined_call_operand.vmem [shape: f32[1,64], index: 8, kind: input, shape index: {}]
  %s9 = inlined_call_operand.vmem [shape: f32[1,64], index: 9, kind: input, shape index: {}]
  %s10 = inlined_call_operand.vmem [shape: f32[4,64], index: 10, kind: input, shape index: {}]
  %s11 = inlined_call_operand.hbm [shape: f32[2,8,128], index: 11, kind: output, shape index: {}]
  %s12 = sld [smem:[#allocation0]]
  $region93: #{tpu_custom_call.1} parent=0
    _
  %s14 = ssub.s32 1, %s12
  %s15 = scalar_select 0, %s14, %s12
  $region1: #{tpu_custom_call.1} parent=0
    #allocation3 [shape = 'u8[16384]{0}', space=vmem, size = 0x4000, scoped, tag = 'input window, operand 0']
    #allocation4 [shape = 's32[2]{0}', space=sflag, size = 0x8, scoped, tag = 'scoped memory for tpu_custom_call.1']
    #allocation5 [shape = 's32[2]{0}', space=sflag, size = 0x8, scoped, tag = 'scoped memory for tpu_custom_call.1']
    #allocation6 [shape = 'u8[20480]{0}', space=vmem, size = 0x5000, scoped, tag = 'input window, operand 1, single buffered']
    #allocation7 [shape = 's32[1]{0}', space=sflag, size = 0x4, scoped, tag = 'scoped memory for tpu_custom_call.1']
    #allocation8 [shape = 'u8[61440]{0}', space=vmem, size = 0xf000, scoped, tag = 'input window, operand 4, single buffered']
    #allocation9 [shape = 'u8[81920]{0}', space=vmem, size = 0x14000, scoped, tag = 'input window, operand 7, single buffered']
    #allocation10 [shape = 's32[1]{0}', space=sflag, size = 0x4, scoped, tag = 'scoped memory for tpu_custom_call.1']
    #allocation11 [shape = 'u8[8192]{0}', space=vmem, size = 0x2000, scoped, tag = 'output window, operand 0']
    %16 = vsyncpa [#allocation4], 0
    %s17 = scalar_lea.sflag [#allocation4], 1
    %18 = vsyncpa %s17, 0
    %19 = vsyncpa [#allocation7], 0
    %20 = vsyncpa [#allocation10], 0
    %21 = vsyncpa [#allocation5], 0
    %s22 = scalar_lea.sflag [#allocation5], 1
    %23 = vsyncpa %s22, 0
    loop: start=0, step=1, limit=4
    $region2: #{tpu_custom_call.1} parent=1 // loop_pre_header
      _
    $region3: #{tpu_custom_call.1} parent=1 // loop_header
      %s25 = sphi 0, %s29
      %p26 = scmp.ge.s32.totalorder %s25, 4
      %s35 = sphi 0, %s37
      %s38 = sphi 0, %s35
      %s39 = sphi 0, %s38
      %s55 = sphi 0, %s39
      %s59 = sphi 0, %s59
      %s61 = sphi 0, %s59
      %s62 = sphi 0, %s61
      %s76 = sphi 0, %s62
      %s80 = sphi 0, %s80
      %s82 = sphi 0, %s80
      %s83 = sphi 0, %s82
      %s97 = sphi 0, %s83
      %s101 = sphi 0, %s101
      %s103 = sphi 0, %s101
      %s104 = sphi 0, %s103
      %s118 = sphi 0, %s104
      %s122 = sphi 0, %s122
      %s124 = sphi 0, %s122
      %s125 = sphi 0, %s124
      %s139 = sphi 0, %s125
      %s143 = sphi 0, %s143
      %s145 = sphi 0, %s143
      %s146 = sphi 0, %s145
      %s160 = sphi 0, %s146
      %s164 = sphi 0, %s164
      %s166 = sphi 0, %s164
      %s167 = sphi 0, %s166
      %s181 = sphi 0, %s167
      %s185 = sphi 0, %s185
      %s187 = sphi 0, %s185
      %s188 = sphi 0, %s187
      %s202 = sphi 0, %s188
      %s206 = sphi 0, %s206
      %s208 = sphi 0, %s206
      %s209 = sphi 0, %s208
      %s223 = sphi 0, %s209
      %s227 = sphi 0, %s227
      %s229 = sphi 0, %s227
      %s230 = sphi 0, %s229
      %s244 = sphi 0, %s230
      %s248 = sphi 0, %s248
      %s250 = sphi 0, %s248
      %s251 = sphi 0, %s250
      %s265 = sphi 0, %s251
      %s271 = sphi 0, %s273
      %s274 = sphi 0, %s271
      %s275 = sphi 0, %s274
      %s291 = sphi 0, %s275
    $region4: #{tpu_custom_call.1} parent=1 // loop_header_branch
      %28 = sbr.rel (%p26) target = $region8
    $region5: #{tpu_custom_call.1} parent=1 // loop_body
      %s30 = ssub.s32 %s25, 1
      %s31 = ssub.s32 %s25, 2
      %s32 = sadd.s32 %s25, 1
      %s33 = ssub.s32 %s25, %s32
      %p34 = scmp.eq.s32.totalorder %s33, 0
      %s36 = sadd.s32 %s35, 1
      %s37 = scalar_select %p34, %s35, %s36
      %p40 = pneg %p34
      %p41 = scmp.eq.s32.totalorder %s25, 1
      %p42 = por %p40, %p41
      %p43 = scmp.ne.s32.totalorder %s35, %s38
      %p44 = scmp.eq.s32.totalorder %s25, 0
      %p45 = por %p43, %p44
      %p46 = scmp.ne.s32.totalorder %s35, %s38
      %p47 = scmp.eq.s32.totalorder %s30, 1
      %p48 = por %p46, %p47
      %p49 = scmp.ne.s32.totalorder %s38, %s39
      %p50 = scmp.eq.s32.totalorder %s30, 0
      %p51 = por %p49, %p50
      %p52 = scmp.ne.s32.totalorder %s38, %s39
      %p53 = scmp.eq.s32.totalorder %s31, 1
      %p54 = por %p52, %p53
      %p56 = scmp.ne.s32.totalorder %s39, %s55
      %p57 = scmp.eq.s32.totalorder %s31, 0
      %p58 = por %p56, %p57
      %s60 = sadd.s32 %s59, 1
      %p63 = scmp.eq.s32.totalorder %s25, 1
      %p64 = scmp.ne.s32.totalorder %s59, %s61
      %p65 = scmp.eq.s32.totalorder %s25, 0
      %p66 = por %p64, %p65
      %p67 = scmp.ne.s32.totalorder %s59, %s61
      %p68 = scmp.eq.s32.totalorder %s30, 1
      %p69 = por %p67, %p68
      %p70 = scmp.ne.s32.totalorder %s61, %s62
      %p71 = scmp.eq.s32.totalorder %s30, 0
      %p72 = por %p70, %p71
      %p73 = scmp.ne.s32.totalorder %s61, %s62
      %p74 = scmp.eq.s32.totalorder %s31, 1
      %p75 = por %p73, %p74
      %p77 = scmp.ne.s32.totalorder %s62, %s76
      %p78 = scmp.eq.s32.totalorder %s31, 0
      %p79 = por %p77, %p78
      %s81 = sadd.s32 %s80, 1
      %p84 = scmp.eq.s32.totalorder %s25, 1
      %p85 = scmp.ne.s32.totalorder %s80, %s82
      %p86 = scmp.eq.s32.totalorder %s25, 0
      %p87 = por %p85, %p86
      %p88 = scmp.ne.s32.totalorder %s80, %s82
      %p89 = scmp.eq.s32.totalorder %s30, 1
      %p90 = por %p88, %p89
      %p91 = scmp.ne.s32.totalorder %s82, %s83
      %p92 = scmp.eq.s32.totalorder %s30, 0
      %p93 = por %p91, %p92
      %p94 = scmp.ne.s32.totalorder %s82, %s83
      %p95 = scmp.eq.s32.totalorder %s31, 1
      %p96 = por %p94, %p95
      %p98 = scmp.ne.s32.totalorder %s83, %s97
      %p99 = scmp.eq.s32.totalorder %s31, 0
      %p100 = por %p98, %p99
      %s102 = sadd.s32 %s101, 1
      %p105 = scmp.eq.s32.totalorder %s25, 1
      %p106 = scmp.ne.s32.totalorder %s101, %s103
      %p107 = scmp.eq.s32.totalorder %s25, 0
      %p108 = por %p106, %p107
      %p109 = scmp.ne.s32.totalorder %s101, %s103
      %p110 = scmp.eq.s32.totalorder %s30, 1
      %p111 = por %p109, %p110
      %p112 = scmp.ne.s32.totalorder %s103, %s104
      %p113 = scmp.eq.s32.totalorder %s30, 0
      %p114 = por %p112, %p113
      %p115 = scmp.ne.s32.totalorder %s103, %s104
      %p116 = scmp.eq.s32.totalorder %s31, 1
      %p117 = por %p115, %p116
      %p119 = scmp.ne.s32.totalorder %s104, %s118
      %p120 = scmp.eq.s32.totalorder %s31, 0
      %p121 = por %p119, %p120
      %s123 = sadd.s32 %s122, 1
      %p126 = scmp.eq.s32.totalorder %s25, 1
      %p127 = scmp.ne.s32.totalorder %s122, %s124
      %p128 = scmp.eq.s32.totalorder %s25, 0
      %p129 = por %p127, %p128
      %p130 = scmp.ne.s32.totalorder %s122, %s124
      %p131 = scmp.eq.s32.totalorder %s30, 1
      %p132 = por %p130, %p131
      %p133 = scmp.ne.s32.totalorder %s124, %s125
      %p134 = scmp.eq.s32.totalorder %s30, 0
      %p135 = por %p133, %p134
      %p136 = scmp.ne.s32.totalorder %s124, %s125
      %p137 = scmp.eq.s32.totalorder %s31, 1
      %p138 = por %p136, %p137
      %p140 = scmp.ne.s32.totalorder %s125, %s139
      %p141 = scmp.eq.s32.totalorder %s31, 0
      %p142 = por %p140, %p141
      %s144 = sadd.s32 %s143, 1
      %p147 = scmp.eq.s32.totalorder %s25, 1
      %p148 = scmp.ne.s32.totalorder %s143, %s145
      %p149 = scmp.eq.s32.totalorder %s25, 0
      %p150 = por %p148, %p149
      %p151 = scmp.ne.s32.totalorder %s143, %s145
      %p152 = scmp.eq.s32.totalorder %s30, 1
      %p153 = por %p151, %p152
      %p154 = scmp.ne.s32.totalorder %s145, %s146
      %p155 = scmp.eq.s32.totalorder %s30, 0
      %p156 = por %p154, %p155
      %p157 = scmp.ne.s32.totalorder %s145, %s146
      %p158 = scmp.eq.s32.totalorder %s31, 1
      %p159 = por %p157, %p158
      %p161 = scmp.ne.s32.totalorder %s146, %s160
      %p162 = scmp.eq.s32.totalorder %s31, 0
      %p163 = por %p161, %p162
      %s165 = sadd.s32 %s164, 1
      %p168 = scmp.eq.s32.totalorder %s25, 1
      %p169 = scmp.ne.s32.totalorder %s164, %s166
      %p170 = scmp.eq.s32.totalorder %s25, 0
      %p171 = por %p169, %p170
      %p172 = scmp.ne.s32.totalorder %s164, %s166
      %p173 = scmp.eq.s32.totalorder %s30, 1
      %p174 = por %p172, %p173
      %p175 = scmp.ne.s32.totalorder %s166, %s167
      %p176 = scmp.eq.s32.totalorder %s30, 0
      %p177 = por %p175, %p176
      %p178 = scmp.ne.s32.totalorder %s166, %s167
      %p179 = scmp.eq.s32.totalorder %s31, 1
      %p180 = por %p178, %p179
      %p182 = scmp.ne.s32.totalorder %s167, %s181
      %p183 = scmp.eq.s32.totalorder %s31, 0
      %p184 = por %p182, %p183
      %s186 = sadd.s32 %s185, 1
      %p189 = scmp.eq.s32.totalorder %s25, 1
      %p190 = scmp.ne.s32.totalorder %s185, %s187
      %p191 = scmp.eq.s32.totalorder %s25, 0
      %p192 = por %p190, %p191
      %p193 = scmp.ne.s32.totalorder %s185, %s187
      %p194 = scmp.eq.s32.totalorder %s30, 1
      %p195 = por %p193, %p194
      %p196 = scmp.ne.s32.totalorder %s187, %s188
      %p197 = scmp.eq.s32.totalorder %s30, 0
      %p198 = por %p196, %p197
      %p199 = scmp.ne.s32.totalorder %s187, %s188
      %p200 = scmp.eq.s32.totalorder %s31, 1
      %p201 = por %p199, %p200
      %p203 = scmp.ne.s32.totalorder %s188, %s202
      %p204 = scmp.eq.s32.totalorder %s31, 0
      %p205 = por %p203, %p204
      %s207 = sadd.s32 %s206, 1
      %p210 = scmp.eq.s32.totalorder %s25, 1
      %p211 = scmp.ne.s32.totalorder %s206, %s208
      %p212 = scmp.eq.s32.totalorder %s25, 0
      %p213 = por %p211, %p212
      %p214 = scmp.ne.s32.totalorder %s206, %s208
      %p215 = scmp.eq.s32.totalorder %s30, 1
      %p216 = por %p214, %p215
      %p217 = scmp.ne.s32.totalorder %s208, %s209
      %p218 = scmp.eq.s32.totalorder %s30, 0
      %p219 = por %p217, %p218
      %p220 = scmp.ne.s32.totalorder %s208, %s209
      %p221 = scmp.eq.s32.totalorder %s31, 1
      %p222 = por %p220, %p221
      %p224 = scmp.ne.s32.totalorder %s209, %s223
      %p225 = scmp.eq.s32.totalorder %s31, 0
      %p226 = por %p224, %p225
      %s228 = sadd.s32 %s227, 1
      %p231 = scmp.eq.s32.totalorder %s25, 1
      %p232 = scmp.ne.s32.totalorder %s227, %s229
      %p233 = scmp.eq.s32.totalorder %s25, 0
      %p234 = por %p232, %p233
      %p235 = scmp.ne.s32.totalorder %s227, %s229
      %p236 = scmp.eq.s32.totalorder %s30, 1
      %p237 = por %p235, %p236
      %p238 = scmp.ne.s32.totalorder %s229, %s230
      %p239 = scmp.eq.s32.totalorder %s30, 0
      %p240 = por %p238, %p239
      %p241 = scmp.ne.s32.totalorder %s229, %s230
      %p242 = scmp.eq.s32.totalorder %s31, 1
      %p243 = por %p241, %p242
      %p245 = scmp.ne.s32.totalorder %s230, %s244
      %p246 = scmp.eq.s32.totalorder %s31, 0
      %p247 = por %p245, %p246
      %s249 = sadd.s32 %s248, 1
      %p252 = scmp.eq.s32.totalorder %s25, 1
      %p253 = scmp.ne.s32.totalorder %s248, %s250
      %p254 = scmp.eq.s32.totalorder %s25, 0
      %p255 = por %p253, %p254
      %p256 = scmp.ne.s32.totalorder %s248, %s250
      %p257 = scmp.eq.s32.totalorder %s30, 1
      %p258 = por %p256, %p257
      %p259 = scmp.ne.s32.totalorder %s250, %s251
      %p260 = scmp.eq.s32.totalorder %s30, 0
      %p261 = por %p259, %p260
      %p262 = scmp.ne.s32.totalorder %s250, %s251
      %p263 = scmp.eq.s32.totalorder %s31, 1
      %p264 = por %p262, %p263
      %p266 = scmp.ne.s32.totalorder %s251, %s265
      %p267 = scmp.eq.s32.totalorder %s31, 0
      %p268 = por %p266, %p267
      %s269 = ssub.s32 %s25, %s32
      %p270 = scmp.eq.s32.totalorder %s269, 0
      %s272 = sadd.s32 %s271, 1
      %s273 = scalar_select %p270, %s271, %s272
      %p276 = pneg %p270
      %p277 = scmp.eq.s32.totalorder %s25, 1
      %p278 = por %p276, %p277
      %p279 = scmp.ne.s32.totalorder %s271, %s274
      %p280 = scmp.eq.s32.totalorder %s25, 0
      %p281 = por %p279, %p280
      %p282 = scmp.ne.s32.totalorder %s271, %s274
      %p283 = scmp.eq.s32.totalorder %s30, 1
      %p284 = por %p282, %p283
      %p285 = scmp.ne.s32.totalorder %s274, %s275
      %p286 = scmp.eq.s32.totalorder %s30, 0
      %p287 = por %p285, %p286
      %p288 = scmp.ne.s32.totalorder %s274, %s275
      %p289 = scmp.eq.s32.totalorder %s31, 1
      %p290 = por %p288, %p289
      %p292 = scmp.ne.s32.totalorder %s275, %s291
      %p293 = scmp.eq.s32.totalorder %s31, 0
      %p294 = por %p292, %p293
      %p295 = scmp.le.s32.totalorder 1, %s25
      %p296 = scmp.lt.s32.totalorder %s25, 3
      %p297 = pnand %p295, %p296
      %p298 = pneg %p297
      // Predicated region
      $region9: #{tpu_custom_call.1} parent=5 // pred_check
        _
      $region10: #{tpu_custom_call.1} parent=5 // pred_check_branch
        %300 = sbr.rel (%p297) target = $region12
      $region11: #{tpu_custom_call.1} parent=5 // pred_region
        %s301 = ssub.s32 %s25, 1
        // Predicated region
        $region13: #{tpu_custom_call.1} parent=11 // pred_check
          %p302 = pneg %p72
        $region14: #{tpu_custom_call.1} parent=11 // pred_check_branch
          %304 = sbr.rel (%p302) target = $region16
        $region15: #{tpu_custom_call.1} parent=11 // pred_region
          %s306 = ssub.s32 640, 640
          %307 = vsyncadd [#allocation7], %s306
          %s308 = sshll.u32 [#allocation6], 4
          %s309 = int_to_ptr.vmem [resolvable:$true] %s308
          %314 = dma.hbm_to_vmem [thread:$0]  %s1, 640, %s309, [#allocation7], 64, 64, 4
        $region16: #{tpu_custom_call.1} parent=11 // pred_fallthru
          _
        // Predicated region
        $region17: #{tpu_custom_call.1} parent=11 // pred_check
          %p315 = pneg %p93
        $region18: #{tpu_custom_call.1} parent=11 // pred_check_branch
          %317 = sbr.rel (%p315) target = $region20
        $region19: #{tpu_custom_call.1} parent=11 // pred_region
          _
        $region20: #{tpu_custom_call.1} parent=11 // pred_fallthru
          _
        // Predicated region
        $region21: #{tpu_custom_call.1} parent=11 // pred_check
          %p318 = pneg %p114
        $region22: #{tpu_custom_call.1} parent=11 // pred_check_branch
          %320 = sbr.rel (%p318) target = $region24
        $region23: #{tpu_custom_call.1} parent=11 // pred_region
          _
        $region24: #{tpu_custom_call.1} parent=11 // pred_fallthru
          _
        // Predicated region
        $region25: #{tpu_custom_call.1} parent=11 // pred_check
          %p321 = pneg %p135
        $region26: #{tpu_custom_call.1} parent=11 // pred_check_branch
          %323 = sbr.rel (%p321) target = $region28
        $region27: #{tpu_custom_call.1} parent=11 // pred_region
          %s325 = ssub.s32 1920, 1920
          %326 = vsyncadd [#allocation7], %s325
          %s327 = sshll.u32 [#allocation8], 4
          %s328 = int_to_ptr.vmem [resolvable:$true] %s327
          %333 = dma.hbm_to_vmem [thread:$0]  %s4, 1920, %s328, [#allocation7], 64, 64, 4
        $region28: #{tpu_custom_call.1} parent=11 // pred_fallthru
          _
        // Predicated region
        $region29: #{tpu_custom_call.1} parent=11 // pred_check
          %p334 = pneg %p156
        $region30: #{tpu_custom_call.1} parent=11 // pred_check_branch
          %336 = sbr.rel (%p334) target = $region32
        $region31: #{tpu_custom_call.1} parent=11 // pred_region
          _
        $region32: #{tpu_custom_call.1} parent=11 // pred_fallthru
          _
        // Predicated region
        $region33: #{tpu_custom_call.1} parent=11 // pred_check
          %p337 = pneg %p177
        $region34: #{tpu_custom_call.1} parent=11 // pred_check_branch
          %339 = sbr.rel (%p337) target = $region36
        $region35: #{tpu_custom_call.1} parent=11 // pred_region
          _
        $region36: #{tpu_custom_call.1} parent=11 // pred_fallthru
          _
        // Predicated region
        $region37: #{tpu_custom_call.1} parent=11 // pred_check
          %p340 = pneg %p198
        $region38: #{tpu_custom_call.1} parent=11 // pred_check_branch
          %342 = sbr.rel (%p340) target = $region40
        $region39: #{tpu_custom_call.1} parent=11 // pred_region
          %s344 = ssub.s32 2560, 2560
          %345 = vsyncadd [#allocation10], %s344
          %s346 = sshll.u32 [#allocation9], 4
          %s347 = int_to_ptr.vmem [resolvable:$true] %s346
          %352 = dma.hbm_to_vmem [thread:$0]  %s7, 2560, %s347, [#allocation10], 64, 64, 4
        $region40: #{tpu_custom_call.1} parent=11 // pred_fallthru
          _
        // Predicated region
        $region41: #{tpu_custom_call.1} parent=11 // pred_check
          %p353 = pneg %p219
        $region42: #{tpu_custom_call.1} parent=11 // pred_check_branch
          %355 = sbr.rel (%p353) target = $region44
        $region43: #{tpu_custom_call.1} parent=11 // pred_region
          _
        $region44: #{tpu_custom_call.1} parent=11 // pred_fallthru
          _
        // Predicated region
        $region45: #{tpu_custom_call.1} parent=11 // pred_check
          %p356 = pneg %p240
        $region46: #{tpu_custom_call.1} parent=11 // pred_check_branch
          %358 = sbr.rel (%p356) target = $region48
        $region47: #{tpu_custom_call.1} parent=11 // pred_region
          _
        $region48: #{tpu_custom_call.1} parent=11 // pred_fallthru
          _
        // Predicated region
        $region49: #{tpu_custom_call.1} parent=11 // pred_check
          %p359 = pneg %p261
        $region50: #{tpu_custom_call.1} parent=11 // pred_check_branch
          %361 = sbr.rel (%p359) target = $region52
        $region51: #{tpu_custom_call.1} parent=11 // pred_region
          _
        $region52: #{tpu_custom_call.1} parent=11 // pred_fallthru
          _
      $region12: #{tpu_custom_call.1} parent=5 // pred_fallthru
        _
      %p362 = scmp.lt.s32.totalorder %s25, 2
      // Predicated region
      $region53: #{tpu_custom_call.1} parent=5 // pred_check
        %p363 = pneg %p362
      $region54: #{tpu_custom_call.1} parent=5 // pred_check_branch
        %365 = sbr.rel (%p363) target = $region56
      $region55: #{tpu_custom_call.1} parent=5 // pred_region
        // Predicated region
        $region57: #{tpu_custom_call.1} parent=55 // pred_check
          %p366 = pneg %p45
        $region58: #{tpu_custom_call.1} parent=55 // pred_check_branch
          %368 = sbr.rel (%p366) target = $region60
        $region59: #{tpu_custom_call.1} parent=55 // pred_region
          %s369 = sand.u32 %s35, 1
          %s370 = scalar_lea.sflag [#allocation4], %s369
          %s371 = sand.u32 %s35, 1
          %s372 = smul.addr %s371, 16
          %s373 = scalar_lea.vmem [#allocation3], %s372
          %s375 = ssub.s32 256, 256
          %376 = vsyncadd %s370, %s375
          %s377 = smul.addr %s25, 2
          %s378 = smul.addr %s377, 128
          %s379 = scalar_lea.hbm %s0, %s378
          %s380 = sshll.u32 %s373, 4
          %s381 = int_to_ptr.vmem [resolvable:$true] %s380
          %386 = dma.hbm_to_vmem [thread:$0]  %s379, 256, %s381, %s370, 128, 128, 8
        $region60: #{tpu_custom_call.1} parent=55 // pred_fallthru
          _
      $region56: #{tpu_custom_call.1} parent=5 // pred_fallthru
        _
      %p387 = scmp.le.s32.totalorder 1, %s25
      %p388 = scmp.lt.s32.totalorder %s25, 3
      %p389 = pnand %p387, %p388
      %p390 = pneg %p389
      // Predicated region
      $region61: #{tpu_custom_call.1} parent=5 // pred_check
        _
      $region62: #{tpu_custom_call.1} parent=5 // pred_check_branch
        %392 = sbr.rel (%p389) target = $region64
      $region63: #{tpu_custom_call.1} parent=5 // pred_region
        %s393 = ssub.s32 %s25, 1
        %s394 = sand.u32 %s38, 1
        %s395 = scalar_lea.sflag [#allocation4], %s394
        %s396 = sand.u32 %s38, 1
        %s397 = smul.addr %s396, 16
        %s398 = scalar_lea.vmem [#allocation3], %s397
        // Predicated region
        $region65: #{tpu_custom_call.1} parent=63 // pred_check
          %p399 = pneg %p51
        $region66: #{tpu_custom_call.1} parent=63 // pred_check_branch
          %401 = sbr.rel (%p399) target = $region68
        $region67: #{tpu_custom_call.1} parent=63 // pred_region
          %402 = dma.done %s395, 256
        $region68: #{tpu_custom_call.1} parent=63 // pred_fallthru
          _
        // Predicated region
        $region69: #{tpu_custom_call.1} parent=63 // pred_check
          %p403 = pneg %p72
        $region70: #{tpu_custom_call.1} parent=63 // pred_check_branch
          %405 = sbr.rel (%p403) target = $region72
        $region71: #{tpu_custom_call.1} parent=63 // pred_region
          %406 = dma.done [#allocation7], 640
        $region72: #{tpu_custom_call.1} parent=63 // pred_fallthru
          _
        // Predicated region
        $region73: #{tpu_custom_call.1} parent=63 // pred_check
          %p407 = pneg %p135
        $region74: #{tpu_custom_call.1} parent=63 // pred_check_branch
          %409 = sbr.rel (%p407) target = $region76
        $region75: #{tpu_custom_call.1} parent=63 // pred_region
          %410 = dma.done [#allocation7], 1920
        $region76: #{tpu_custom_call.1} parent=63 // pred_fallthru
          _
        // Predicated region
        $region77: #{tpu_custom_call.1} parent=63 // pred_check
          %p411 = pneg %p198
        $region78: #{tpu_custom_call.1} parent=63 // pred_check_branch
          %413 = sbr.rel (%p411) target = $region80
        $region79: #{tpu_custom_call.1} parent=63 // pred_region
          %414 = dma.done [#allocation10], 2560
        $region80: #{tpu_custom_call.1} parent=63 // pred_fallthru
          _
        %s415 = sand.u32 %s38, 1
        %s416 = scalar_lea.sflag [#allocation4], %s415
        %s417 = sand.u32 %s38, 1
        %s418 = smul.addr %s417, 16
        %s419 = scalar_lea.vmem [#allocation3], %s418
        %p420 = pneg %p51
        %p421 = pneg %p48
        %p422 = pneg %p72
        %p423 = pneg %p69
        %p424 = pneg %p93
        %p425 = pneg %p90
        %p426 = pneg %p114
        %p427 = pneg %p111
        %p428 = pneg %p135
        %p429 = pneg %p132
        %p430 = pneg %p156
        %p431 = pneg %p153
        %p432 = pneg %p177
        %p433 = pneg %p174
        %p434 = pneg %p198
        %p435 = pneg %p195
        %p436 = pneg %p219
        %p437 = pneg %p216
        %p438 = pneg %p240
        %p439 = pneg %p237
        %p440 = pneg %p261
        %p441 = pneg %p258
        %p442 = pneg %p287
        %p443 = pneg %p284
        %s444 = sand.u32 %s274, 1
        %s445 = scalar_lea.sflag [#allocation5], %s444
        %s446 = sand.u32 %s274, 1
        %s447 = smul.addr %s446, 8
        %s448 = scalar_lea.vmem [#allocation11], %s447
        %v449 = vld [vmem:[%s398] sm:$0xff]
        %v450 = vld [vmem:[%s398 + $0x8] sm:$0xff]
        %vm451 = vcmask 130048
        %452 = vst.msk [vmem:[#allocation2] sm:$0xff] %vm451, %v449
        %453 = vst.msk [vmem:[#allocation2 + $0x8] sm:$0xff] %vm451, %v450
        %v454 = vld [vmem:[#allocation2] sm:$0xff]
        %v455 = vld [vmem:[#allocation2 + $0x8] sm:$0xf]
        %v456 = vld [vmem:[#allocation6] sm:$0xf]
        %v457 = vld [vmem:[#allocation6 + $0x4] sm:$0xf]
        %v458 = vunpack.c.l.bf16 %v456
        %v459 = vunpack.c.l.bf16 %v457
        %v460 = vld [vmem:[#allocation2 + $0x1] sm:$0xff]
        %v461 = vld [vmem:[#allocation2 + $0x9] sm:$0xf]
        %s462 = scalar_lea.vmem [#allocation6], 8
        %v463 = vld [vmem:[%s462] sm:$0xf]
        %v464 = vld [vmem:[%s462 + $0x4] sm:$0xf]
        %v465 = vunpack.c.l.bf16 %v463
        %v466 = vunpack.c.l.bf16 %v464
        %v468 = vsel %vm451, %v460, 0
        %v471 = vsel %vm451, %v461, 0
        %473 = vmatprep.subr.mxu0 0.0
        %474 = vmatpush1.msra.mxu0 %v465
        %475 = vmatprep.subr.mxu0 0.0
        %476 = vmatpush1.msra.mxu0 %v466
        %477 = vmatprep.subr.mxu0 0.0
        %478 = vmatpush1.msra.mxu0 0.0
        %479 = vmatprep.subr.mxu0 0.0
        %480 = vmatpush1.msra.mxu0 0.0
        %481 = vmatprep.subr.mxu0 0.0
        %482 = vmatpush1.msra.mxu0 0.0
        %483 = vmatprep.subr.mxu0 0.0
        %484 = vmatpush1.msra.mxu0 0.0
        %485 = vmatprep.subr.mxu0 0.0
        %486 = vmatpush1.msra.mxu0 0.0
        %487 = vmatprep.subr.mxu0 0.0
        %488 = vmatpush1.msra.mxu0 0.0
        %489 = vmatprep.subr.mxu0 0.0
        %490 = vmatpush1.msra.mxu0 0.0
        %491 = vmatprep.subr.mxu0 0.0
        %492 = vmatpush1.msra.mxu0 0.0
        %493 = vmatprep.subr.mxu0 0.0
        %494 = vmatpush1.msra.mxu0 0.0
        %495 = vmatprep.subr.mxu0 0.0
        %496 = vmatpush1.msra.mxu0 0.0
        %497 = vmatprep.subr.mxu0 0.0
        %498 = vmatpush1.msra.mxu0 0.0
        %499 = vmatprep.subr.mxu0 0.0
        %500 = vmatpush1.msra.mxu0 0.0
        %501 = vmatprep.subr.mxu0 0.0
        %502 = vmatpush1.msra.mxu0 0.0
        %503 = vmatprep.subr.mxu0 0.0
        %504 = vmatpush1.msra.mxu0 0.0
        %505 = vmatprep.subr.mxu0 0.0
        %506 = vmatpush1.msra.mxu0 0.0
        %507 = vmatprep.subr.mxu0 0.0
        %508 = vmatpush1.msra.mxu0 0.0
        %509 = vmatprep.subr.mxu0 0.0
        %510 = vmatpush1.msra.mxu0 0.0
        %511 = vmatprep.subr.mxu0 0.0
        %512 = vmatpush1.msra.mxu0 0.0
        %513 = vmatprep.subr.mxu0 0.0
        %514 = vmatpush1.msra.mxu0 0.0
        %515 = vmatprep.subr.mxu0 0.0
        %516 = vmatpush1.msra.mxu0 0.0
        %517 = vmatprep.subr.mxu0 0.0
        %518 = vmatpush1.msra.mxu0 0.0
        %519 = vmatprep.subr.mxu0 0.0
        %520 = vmatpush1.msra.mxu0 0.0
        %521 = vmatprep.subr.mxu0 0.0
        %522 = vmatpush1.msra.mxu0 0.0
        %523 = vmatprep.subr.mxu0 0.0
        %524 = vmatpush1.msra.mxu0 0.0
        %525 = vmatprep.subr.mxu0 0.0
        %526 = vmatpush1.msra.mxu0 0.0
        %527 = vmatprep.subr.mxu0 0.0
        %528 = vmatpush1.msra.mxu0 0.0
        %529 = vmatprep.subr.mxu0 0.0
        %530 = vmatpush1.msra.mxu0 0.0
        %531 = vmatprep.subr.mxu0 0.0
        %532 = vmatpush1.msra.mxu0 0.0
        %533 = vmatprep.subr.mxu0 0.0
        %534 = vmatpush1.msra.mxu0 0.0
        %535 = vmatprep.subr.mxu0 0.0
        %536 = vmatpush1.msra.mxu0 0.0
        %537 = vmatprep.mubr.f32.mxu0 0.0
        %538 = vmatmul.mubr.f32.gmra.mrb[0].mxu0 %v468
        %v539 = vpop.f32.mrb[0].mxu0
        %v540 = vadd.f32 0.0, %v539
        %v541 = vpop.f32.mrb[0].mxu0
        %542 = vmatprep.mubr.f32.mxu0 0.0
        %543 = vmatmul.mubr.f32.gmra.mrb[0].mxu0 %v471
        %v544 = vpop.f32.mrb[0].mxu0
        %v545 = vadd.f32 0.0, %v544
        %v546 = vpop.f32.mrb[0].mxu0
        %547 = vdwg.mxu0
        %v549 = vsel %vm451, %v454, 0
        %v552 = vsel %vm451, %v455, 0
        %554 = vmatprep.subr.mxu0 0.0
        %555 = vmatpush1.msra.mxu0 %v458
        %556 = vmatprep.subr.mxu0 0.0
        %557 = vmatpush1.msra.mxu0 %v459
        %558 = vmatprep.subr.mxu0 0.0
        %559 = vmatpush1.msra.mxu0 0.0
        %560 = vmatprep.subr.mxu0 0.0
        %561 = vmatpush1.msra.mxu0 0.0
        %562 = vmatprep.subr.mxu0 0.0
        %563 = vmatpush1.msra.mxu0 0.0
        %564 = vmatprep.subr.mxu0 0.0
        %565 = vmatpush1.msra.mxu0 0.0
        %566 = vmatprep.subr.mxu0 0.0
        %567 = vmatpush1.msra.mxu0 0.0
        %568 = vmatprep.subr.mxu0 0.0
        %569 = vmatpush1.msra.mxu0 0.0
        %570 = vmatprep.subr.mxu0 0.0
        %571 = vmatpush1.msra.mxu0 0.0
        %572 = vmatprep.subr.mxu0 0.0
        %573 = vmatpush1.msra.mxu0 0.0
        %574 = vmatprep.subr.mxu0 0.0
        %575 = vmatpush1.msra.mxu0 0.0
        %576 = vmatprep.subr.mxu0 0.0
        %577 = vmatpush1.msra.mxu0 0.0
        %578 = vmatprep.subr.mxu0 0.0
        %579 = vmatpush1.msra.mxu0 0.0
        %580 = vmatprep.subr.mxu0 0.0
        %581 = vmatpush1.msra.mxu0 0.0
        %582 = vmatprep.subr.mxu0 0.0
        %583 = vmatpush1.msra.mxu0 0.0
        %584 = vmatprep.subr.mxu0 0.0
        %585 = vmatpush1.msra.mxu0 0.0
        %586 = vmatprep.subr.mxu0 0.0
        %587 = vmatpush1.msra.mxu0 0.0
        %588 = vmatprep.subr.mxu0 0.0
        %589 = vmatpush1.msra.mxu0 0.0
        %590 = vmatprep.subr.mxu0 0.0
        %591 = vmatpush1.msra.mxu0 0.0
        %592 = vmatprep.subr.mxu0 0.0
        %593 = vmatpush1.msra.mxu0 0.0
        %594 = vmatprep.subr.mxu0 0.0
        %595 = vmatpush1.msra.mxu0 0.0
        %596 = vmatprep.subr.mxu0 0.0
        %597 = vmatpush1.msra.mxu0 0.0
        %598 = vmatprep.subr.mxu0 0.0
        %599 = vmatpush1.msra.mxu0 0.0
        %600 = vmatprep.subr.mxu0 0.0
        %601 = vmatpush1.msra.mxu0 0.0
        %602 = vmatprep.subr.mxu0 0.0
        %603 = vmatpush1.msra.mxu0 0.0
        %604 = vmatprep.subr.mxu0 0.0
        %605 = vmatpush1.msra.mxu0 0.0
        %606 = vmatprep.subr.mxu0 0.0
        %607 = vmatpush1.msra.mxu0 0.0
        %608 = vmatprep.subr.mxu0 0.0
        %609 = vmatpush1.msra.mxu0 0.0
        %610 = vmatprep.subr.mxu0 0.0
        %611 = vmatpush1.msra.mxu0 0.0
        %612 = vmatprep.subr.mxu0 0.0
        %613 = vmatpush1.msra.mxu0 0.0
        %614 = vmatprep.subr.mxu0 0.0
        %615 = vmatpush1.msra.mxu0 0.0
        %616 = vmatprep.subr.mxu0 0.0
        %617 = vmatpush1.msra.mxu0 0.0
        %618 = vmatprep.mubr.f32.mxu0 0.0
        %619 = vmatmul.mubr.f32.gmra.mrb[0].mxu0 %v549
        %v620 = vpop.f32.mrb[0].mxu0
        %v621 = vadd.f32 %v540, %v620
        %v622 = vpop.f32.mrb[0].mxu0
        %623 = vmatprep.mubr.f32.mxu0 0.0
        %624 = vmatmul.mubr.f32.gmra.mrb[0].mxu0 %v552
        %v625 = vpop.f32.mrb[0].mxu0
        %v626 = vadd.f32 %v545, %v625
        %v627 = vpop.f32.mrb[0].mxu0
        %628 = vdwg.mxu0
        %v629 = vld [vmem:[#allocation2 + $0x2] sm:$0xff]
        %v630 = vld [vmem:[#allocation2 + $0xa] sm:$0xf]
        %s631 = scalar_lea.vmem [#allocation6], 16
        %v632 = vld [vmem:[%s631] sm:$0xf]
        %v633 = vld [vmem:[%s631 + $0x4] sm:$0xf]
        %v634 = vunpack.c.l.bf16 %v632
        %v635 = vunpack.c.l.bf16 %v633
        %v637 = vsel %vm451, %v629, 0
        %v640 = vsel %vm451, %v630, 0
        %642 = vmatprep.subr.mxu0 0.0
        %643 = vmatpush1.msra.mxu0 %v634
        %644 = vmatprep.subr.mxu0 0.0
        %645 = vmatpush1.msra.mxu0 %v635
        %646 = vmatprep.subr.mxu0 0.0
        %647 = vmatpush1.msra.mxu0 0.0
        %648 = vmatprep.subr.mxu0 0.0
        %649 = vmatpush1.msra.mxu0 0.0
        %650 = vmatprep.subr.mxu0 0.0
        %651 = vmatpush1.msra.mxu0 0.0
        %652 = vmatprep.subr.mxu0 0.0
        %653 = vmatpush1.msra.mxu0 0.0
        %654 = vmatprep.subr.mxu0 0.0
        %655 = vmatpush1.msra.mxu0 0.0
        %656 = vmatprep.subr.mxu0 0.0
        %657 = vmatpush1.msra.mxu0 0.0
        %658 = vmatprep.subr.mxu0 0.0
        %659 = vmatpush1.msra.mxu0 0.0
        %660 = vmatprep.subr.mxu0 0.0
        %661 = vmatpush1.msra.mxu0 0.0
        %662 = vmatprep.subr.mxu0 0.0
        %663 = vmatpush1.msra.mxu0 0.0
        %664 = vmatprep.subr.mxu0 0.0
        %665 = vmatpush1.msra.mxu0 0.0
        %666 = vmatprep.subr.mxu0 0.0
        %667 = vmatpush1.msra.mxu0 0.0
        %668 = vmatprep.subr.mxu0 0.0
        %669 = vmatpush1.msra.mxu0 0.0
        %670 = vmatprep.subr.mxu0 0.0
        %671 = vmatpush1.msra.mxu0 0.0
        %672 = vmatprep.subr.mxu0 0.0
        %673 = vmatpush1.msra.mxu0 0.0
        %674 = vmatprep.subr.mxu0 0.0
        %675 = vmatpush1.msra.mxu0 0.0
        %676 = vmatprep.subr.mxu0 0.0
        %677 = vmatpush1.msra.mxu0 0.0
        %678 = vmatprep.subr.mxu0 0.0
        %679 = vmatpush1.msra.mxu0 0.0
        %680 = vmatprep.subr.mxu0 0.0
        %681 = vmatpush1.msra.mxu0 0.0
        %682 = vmatprep.subr.mxu0 0.0
        %683 = vmatpush1.msra.mxu0 0.0
        %684 = vmatprep.subr.mxu0 0.0
        %685 = vmatpush1.msra.mxu0 0.0
        %686 = vmatprep.subr.mxu0 0.0
        %687 = vmatpush1.msra.mxu0 0.0
        %688 = vmatprep.subr.mxu0 0.0
        %689 = vmatpush1.msra.mxu0 0.0
        %690 = vmatprep.subr.mxu0 0.0
        %691 = vmatpush1.msra.mxu0 0.0
        %692 = vmatprep.subr.mxu0 0.0
        %693 = vmatpush1.msra.mxu0 0.0
        %694 = vmatprep.subr.mxu0 0.0
        %695 = vmatpush1.msra.mxu0 0.0
        %696 = vmatprep.subr.mxu0 0.0
        %697 = vmatpush1.msra.mxu0 0.0
        %698 = vmatprep.subr.mxu0 0.0
        %699 = vmatpush1.msra.mxu0 0.0
        %700 = vmatprep.subr.mxu0 0.0
        %701 = vmatpush1.msra.mxu0 0.0
        %702 = vmatprep.subr.mxu0 0.0
        %703 = vmatpush1.msra.mxu0 0.0
        %704 = vmatprep.subr.mxu0 0.0
        %705 = vmatpush1.msra.mxu0 0.0
        %706 = vmatprep.mubr.f32.mxu0 0.0
        %707 = vmatmul.mubr.f32.gmra.mrb[0].mxu0 %v637
        %v708 = vpop.f32.mrb[0].mxu0
        %v709 = vadd.f32 0.0, %v708
        %v710 = vpop.f32.mrb[0].mxu0
        %711 = vmatprep.mubr.f32.mxu0 0.0
        %712 = vmatmul.mubr.f32.gmra.mrb[0].mxu0 %v640
        %v713 = vpop.f32.mrb[0].mxu0
        %v714 = vadd.f32 0.0, %v713
        %v715 = vpop.f32.mrb[0].mxu0
        %716 = vdwg.mxu0
        %v717 = vadd.f32 %v621, %v709
        %v718 = vadd.f32 %v626, %v714
        %v719 = vld [vmem:[#allocation2 + $0x3] sm:$0xff]
        %v720 = vld [vmem:[#allocation2 + $0xb] sm:$0xf]
        %s721 = scalar_lea.vmem [#allocation6], 24
        %v722 = vld [vmem:[%s721] sm:$0xf]
        %v723 = vld [vmem:[%s721 + $0x4] sm:$0xf]
        %v724 = vunpack.c.l.bf16 %v722
        %v725 = vunpack.c.l.bf16 %v723
        %v727 = vsel %vm451, %v719, 0
        %v730 = vsel %vm451, %v720, 0
        %732 = vmatprep.subr.mxu0 0.0
        %733 = vmatpush1.msra.mxu0 %v724
        %734 = vmatprep.subr.mxu0 0.0
        %735 = vmatpush1.msra.mxu0 %v725
        %736 = vmatprep.subr.mxu0 0.0
        %737 = vmatpush1.msra.mxu0 0.0
        %738 = vmatprep.subr.mxu0 0.0
        %739 = vmatpush1.msra.mxu0 0.0
        %740 = vmatprep.subr.mxu0 0.0
        %741 = vmatpush1.msra.mxu0 0.0
        %742 = vmatprep.subr.mxu0 0.0
        %743 = vmatpush1.msra.mxu0 0.0
        %744 = vmatprep.subr.mxu0 0.0
        %745 = vmatpush1.msra.mxu0 0.0
        %746 = vmatprep.subr.mxu0 0.0
        %747 = vmatpush1.msra.mxu0 0.0
        %748 = vmatprep.subr.mxu0 0.0
        %749 = vmatpush1.msra.mxu0 0.0
        %750 = vmatprep.subr.mxu0 0.0
        %751 = vmatpush1.msra.mxu0 0.0
        %752 = vmatprep.subr.mxu0 0.0
        %753 = vmatpush1.msra.mxu0 0.0
        %754 = vmatprep.subr.mxu0 0.0
        %755 = vmatpush1.msra.mxu0 0.0
        %756 = vmatprep.subr.mxu0 0.0
        %757 = vmatpush1.msra.mxu0 0.0
        %758 = vmatprep.subr.mxu0 0.0
        %759 = vmatpush1.msra.mxu0 0.0
        %760 = vmatprep.subr.mxu0 0.0
        %761 = vmatpush1.msra.mxu0 0.0
        %762 = vmatprep.subr.mxu0 0.0
        %763 = vmatpush1.msra.mxu0 0.0
        %764 = vmatprep.subr.mxu0 0.0
        %765 = vmatpush1.msra.mxu0 0.0
        %766 = vmatprep.subr.mxu0 0.0
        %767 = vmatpush1.msra.mxu0 0.0
        %768 = vmatprep.subr.mxu0 0.0
        %769 = vmatpush1.msra.mxu0 0.0
        %770 = vmatprep.subr.mxu0 0.0
        %771 = vmatpush1.msra.mxu0 0.0
        %772 = vmatprep.subr.mxu0 0.0
        %773 = vmatpush1.msra.mxu0 0.0
        %774 = vmatprep.subr.mxu0 0.0
        %775 = vmatpush1.msra.mxu0 0.0
        %776 = vmatprep.subr.mxu0 0.0
        %777 = vmatpush1.msra.mxu0 0.0
        %778 = vmatprep.subr.mxu0 0.0
        %779 = vmatpush1.msra.mxu0 0.0
        %780 = vmatprep.subr.mxu0 0.0
        %781 = vmatpush1.msra.mxu0 0.0
        %782 = vmatprep.subr.mxu0 0.0
        %783 = vmatpush1.msra.mxu0 0.0
        %784 = vmatprep.subr.mxu0 0.0
        %785 = vmatpush1.msra.mxu0 0.0
        %786 = vmatprep.subr.mxu0 0.0
        %787 = vmatpush1.msra.mxu0 0.0
        %788 = vmatprep.subr.mxu0 0.0
        %789 = vmatpush1.msra.mxu0 0.0
        %790 = vmatprep.subr.mxu0 0.0
        %791 = vmatpush1.msra.mxu0 0.0
        %792 = vmatprep.subr.mxu0 0.0
        %793 = vmatpush1.msra.mxu0 0.0
        %794 = vmatprep.subr.mxu0 0.0
        %795 = vmatpush1.msra.mxu0 0.0
        %796 = vmatprep.mubr.f32.mxu0 0.0
        %797 = vmatmul.mubr.f32.gmra.mrb[0].mxu0 %v727
        %v798 = vpop.f32.mrb[0].mxu0
        %v799 = vadd.f32 0.0, %v798
        %v800 = vpop.f32.mrb[0].mxu0
        %801 = vmatprep.mubr.f32.mxu0 0.0
        %802 = vmatmul.mubr.f32.gmra.mrb[0].mxu0 %v730
        %v803 = vpop.f32.mrb[0].mxu0
        %v804 = vadd.f32 0.0, %v803
        %v805 = vpop.f32.mrb[0].mxu0
        %806 = vdwg.mxu0
        %v807 = vadd.f32 %v717, %v799
        %v808 = vadd.f32 %v718, %v804
        %v809 = vld [vmem:[#allocation2 + $0x4] sm:$0xff]
        %v810 = vld [vmem:[#allocation2 + $0xc] sm:$0xf]
        %s811 = scalar_lea.vmem [#allocation6], 32
        %v812 = vld [vmem:[%s811] sm:$0xf]
        %v813 = vld [vmem:[%s811 + $0x4] sm:$0xf]
        %v814 = vunpack.c.l.bf16 %v812
        %v815 = vunpack.c.l.bf16 %v813
        %v817 = vsel %vm451, %v809, 0
        %v820 = vsel %vm451, %v810, 0
        %822 = vmatprep.subr.mxu0 0.0
        %823 = vmatpush1.msra.mxu0 %v814
        %824 = vmatprep.subr.mxu0 0.0
        %825 = vmatpush1.msra.mxu0 %v815
        %826 = vmatprep.subr.mxu0 0.0
        %827 = vmatpush1.msra.mxu0 0.0
        %828 = vmatprep.subr.mxu0 0.0
        %829 = vmatpush1.msra.mxu0 0.0
        %830 = vmatprep.subr.mxu0 0.0
        %831 = vmatpush1.msra.mxu0 0.0
        %832 = vmatprep.subr.mxu0 0.0
        %833 = vmatpush1.msra.mxu0 0.0
        %834 = vmatprep.subr.mxu0 0.0
        %835 = vmatpush1.msra.mxu0 0.0
        %836 = vmatprep.subr.mxu0 0.0
        %837 = vmatpush1.msra.mxu0 0.0
        %838 = vmatprep.subr.mxu0 0.0
        %839 = vmatpush1.msra.mxu0 0.0
        %840 = vmatprep.subr.mxu0 0.0
        %841 = vmatpush1.msra.mxu0 0.0
        %842 = vmatprep.subr.mxu0 0.0
        %843 = vmatpush1.msra.mxu0 0.0
        %844 = vmatprep.subr.mxu0 0.0
        %845 = vmatpush1.msra.mxu0 0.0
        %846 = vmatprep.subr.mxu0 0.0
        %847 = vmatpush1.msra.mxu0 0.0
        %848 = vmatprep.subr.mxu0 0.0
        %849 = vmatpush1.msra.mxu0 0.0
        %850 = vmatprep.subr.mxu0 0.0
        %851 = vmatpush1.msra.mxu0 0.0
        %852 = vmatprep.subr.mxu0 0.0
        %853 = vmatpush1.msra.mxu0 0.0
        %854 = vmatprep.subr.mxu0 0.0
        %855 = vmatpush1.msra.mxu0 0.0
        %856 = vmatprep.subr.mxu0 0.0
        %857 = vmatpush1.msra.mxu0 0.0
        %858 = vmatprep.subr.mxu0 0.0
        %859 = vmatpush1.msra.mxu0 0.0
        %860 = vmatprep.subr.mxu0 0.0
        %861 = vmatpush1.msra.mxu0 0.0
        %862 = vmatprep.subr.mxu0 0.0
        %863 = vmatpush1.msra.mxu0 0.0
        %864 = vmatprep.subr.mxu0 0.0
        %865 = vmatpush1.msra.mxu0 0.0
        %866 = vmatprep.subr.mxu0 0.0
        %867 = vmatpush1.msra.mxu0 0.0
        %868 = vmatprep.subr.mxu0 0.0
        %869 = vmatpush1.msra.mxu0 0.0
        %870 = vmatprep.subr.mxu0 0.0
        %871 = vmatpush1.msra.mxu0 0.0
        %872 = vmatprep.subr.mxu0 0.0
        %873 = vmatpush1.msra.mxu0 0.0
        %874 = vmatprep.subr.mxu0 0.0
        %875 = vmatpush1.msra.mxu0 0.0
        %876 = vmatprep.subr.mxu0 0.0
        %877 = vmatpush1.msra.mxu0 0.0
        %878 = vmatprep.subr.mxu0 0.0
        %879 = vmatpush1.msra.mxu0 0.0
        %880 = vmatprep.subr.mxu0 0.0
        %881 = vmatpush1.msra.mxu0 0.0
        %882 = vmatprep.subr.mxu0 0.0
        %883 = vmatpush1.msra.mxu0 0.0
        %884 = vmatprep.subr.mxu0 0.0
        %885 = vmatpush1.msra.mxu0 0.0
        %886 = vmatprep.mubr.f32.mxu0 0.0
        %887 = vmatmul.mubr.f32.gmra.mrb[0].mxu0 %v817
        %v888 = vpop.f32.mrb[0].mxu0
        %v889 = vadd.f32 0.0, %v888
        %v890 = vpop.f32.mrb[0].mxu0
        %891 = vmatprep.mubr.f32.mxu0 0.0
        %892 = vmatmul.mubr.f32.gmra.mrb[0].mxu0 %v820
        %v893 = vpop.f32.mrb[0].mxu0
        %v894 = vadd.f32 0.0, %v893
        %v895 = vpop.f32.mrb[0].mxu0
        %896 = vdwg.mxu0
        %v897 = vadd.f32 %v807, %v889
        %v898 = vadd.f32 %v808, %v894
        %vm899 = vcmask 392192
        %v900 = vsel %vm899, %v897, 0.0
        %901 = vadd.xlane.f32.xlu0 %v900
        %v902 = vpop.xlane.xlu0 %901
        %vm903 = vcmask 388096
        %v904 = vsel %vm903, %v898, 0.0
        %905 = vadd.xlane.f32.xlu0 %v904
        %v906 = vpop.xlane.xlu0 %905
        %vm907 = vcmask 1043456
        %v908 = vsel %vm907, %v906, 0.0
        %v909 = vadd.f32 %v902, %v908
        %v910 = vrot.slane %v909, 4
        %v911 = vadd.f32 %v909, %v910
        %v912 = vrot.slane %v911, 2
        %v913 = vadd.f32 %v911, %v912
        %v914 = vrot.slane %v913, 1
        %v915 = vadd.f32 %v913, %v914
        %v916 = vmul.f32 %v915, 0.0017361111
        %v917 = vsub.f32 %v897, %v916
        %v918 = vsub.f32 %v898, %v916
        %v919 = vmul.f32 %v917, %v917
        %v920 = vmul.f32 %v918, %v918
        %v921 = vsel %vm899, %v919, 0.0
        %922 = vadd.xlane.f32.xlu0 %v921
        %v923 = vpop.xlane.xlu0 %922
        %v924 = vsel %vm903, %v920, 0.0
        %925 = vadd.xlane.f32.xlu0 %v924
        %v926 = vpop.xlane.xlu0 %925
        %v927 = vsel %vm907, %v926, 0.0
        %v928 = vadd.f32 %v923, %v927
        %v929 = vrot.slane %v928, 4
        %v930 = vadd.f32 %v928, %v929
        %v931 = vrot.slane %v930, 2
        %v932 = vadd.f32 %v930, %v931
        %v933 = vrot.slane %v932, 1
        %v934 = vadd.f32 %v932, %v933
        %v935 = vmul.f32 %v934, 0.0017361111
        %v936 = vadd.f32 %v935, 1e-05
        %v937 = vrsqrt.pop %v936
        %v938 = vmul.f32 %v917, %v937
        %v939 = vmul.f32 %v918, %v937
        %v940 = vld [vmem:[%s2] sm:$0x1]
        %v942 = vlaneseq
        %v943 = vshrl.u32 %v942, 7
        %v944 = vsub.s32 0, %v943
        %v945 = vrot.slane %v940, %v944
        %v947 = vmul.f32 %v938, %v945
        %v948 = vmul.f32 %v939, %v945
        %v949 = vld [vmem:[%s3] sm:$0x1]
        %v951 = vlaneseq
        %v952 = vshrl.u32 %v951, 7
        %v953 = vsub.s32 0, %v952
        %v954 = vrot.slane %v949, %v953
        %v956 = vadd.f32 %v947, %v954
        %v957 = vadd.f32 %v948, %v954
        %v958 = vmul.f32 %v956, 0.01
        %v959 = vmul.f32 %v957, 0.01
        %v960 = vmax.f32 %v956, %v958
        %v961 = vmax.f32 %v957, %v959
        %962 = vst.msk [vmem:[#allocation2] sm:$0xff] %vm899, %v960
        %963 = vst.msk [vmem:[#allocation2 + $0x8] sm:$0xf] %vm903, %v961
        %v964 = vld [vmem:[#allocation2] sm:$0xff]
        %v965 = vld [vmem:[#allocation8] sm:$0xf]
        %v966 = vld [vmem:[#allocation8 + $0x4] sm:$0xf]
        %v967 = vld [vmem:[#allocation8 + $0x8] sm:$0xf]
        %v968 = vld [vmem:[#allocation8 + $0xc] sm:$0xf]
        %v969 = vld [vmem:[#allocation8 + $0x10] sm:$0xf]
        %v970 = vld [vmem:[#allocation8 + $0x14] sm:$0xf]
        %v971 = vunpack.c.l.bf16 %v965
        %v972 = vunpack.c.l.bf16 %v966
        %v973 = vunpack.c.l.bf16 %v967
        %v974 = vunpack.c.l.bf16 %v968
        %v975 = vunpack.c.l.bf16 %v969
        %v976 = vunpack.c.l.bf16 %v970
        %v977 = vld [vmem:[#allocation2 + $0x1] sm:$0xff]
        %s978 = scalar_lea.vmem [#allocation8], 24
        %v979 = vld [vmem:[%s978] sm:$0xf]
        %v980 = vld [vmem:[%s978 + $0x4] sm:$0xf]
        %v981 = vld [vmem:[%s978 + $0x8] sm:$0xf]
        %v982 = vld [vmem:[%s978 + $0xc] sm:$0xf]
        %v983 = vld [vmem:[%s978 + $0x10] sm:$0xf]
        %v984 = vld [vmem:[%s978 + $0x14] sm:$0xf]
        %v985 = vunpack.c.l.bf16 %v979
        %v986 = vunpack.c.l.bf16 %v980
        %v987 = vunpack.c.l.bf16 %v981
        %v988 = vunpack.c.l.bf16 %v982
        %v989 = vunpack.c.l.bf16 %v983
        %v990 = vunpack.c.l.bf16 %v984
        %v992 = vsel %vm899, %v977, 0
        %994 = vmatprep.subr.mxu0 0.0
        %995 = vmatpush1.msra.mxu0 %v985
        %996 = vmatprep.subr.mxu0 0.0
        %997 = vmatpush1.msra.mxu0 %v986
        %998 = vmatprep.subr.mxu0 0.0
        %999 = vmatpush1.msra.mxu0 %v987
        %1000 = vmatprep.subr.mxu0 0.0
        %1001 = vmatpush1.msra.mxu0 %v988
        %1002 = vmatprep.subr.mxu0 0.0
        %1003 = vmatpush1.msra.mxu0 %v989
        %1004 = vmatprep.subr.mxu0 0.0
        %1005 = vmatpush1.msra.mxu0 %v990
        %1006 = vmatprep.subr.mxu0 0.0
        %1007 = vmatpush1.msra.mxu0 0.0
        %1008 = vmatprep.subr.mxu0 0.0
        %1009 = vmatpush1.msra.mxu0 0.0
        %1010 = vmatprep.subr.mxu0 0.0
        %1011 = vmatpush1.msra.mxu0 0.0
        %1012 = vmatprep.subr.mxu0 0.0
        %1013 = vmatpush1.msra.mxu0 0.0
        %1014 = vmatprep.subr.mxu0 0.0
        %1015 = vmatpush1.msra.mxu0 0.0
        %1016 = vmatprep.subr.mxu0 0.0
        %1017 = vmatpush1.msra.mxu0 0.0
        %1018 = vmatprep.subr.mxu0 0.0
        %1019 = vmatpush1.msra.mxu0 0.0
        %1020 = vmatprep.subr.mxu0 0.0
        %1021 = vmatpush1.msra.mxu0 0.0
        %1022 = vmatprep.subr.mxu0 0.0
        %1023 = vmatpush1.msra.mxu0 0.0
        %1024 = vmatprep.subr.mxu0 0.0
        %1025 = vmatpush1.msra.mxu0 0.0
        %1026 = vmatprep.subr.mxu0 0.0
        %1027 = vmatpush1.msra.mxu0 0.0
        %1028 = vmatprep.subr.mxu0 0.0
        %1029 = vmatpush1.msra.mxu0 0.0
        %1030 = vmatprep.subr.mxu0 0.0
        %1031 = vmatpush1.msra.mxu0 0.0
        %1032 = vmatprep.subr.mxu0 0.0
        %1033 = vmatpush1.msra.mxu0 0.0
        %1034 = vmatprep.subr.mxu0 0.0
        %1035 = vmatpush1.msra.mxu0 0.0
        %1036 = vmatprep.subr.mxu0 0.0
        %1037 = vmatpush1.msra.mxu0 0.0
        %1038 = vmatprep.subr.mxu0 0.0
        %1039 = vmatpush1.msra.mxu0 0.0
        %1040 = vmatprep.subr.mxu0 0.0
        %1041 = vmatpush1.msra.mxu0 0.0
        %1042 = vmatprep.subr.mxu0 0.0
        %1043 = vmatpush1.msra.mxu0 0.0
        %1044 = vmatprep.subr.mxu0 0.0
        %1045 = vmatpush1.msra.mxu0 0.0
        %1046 = vmatprep.subr.mxu0 0.0
        %1047 = vmatpush1.msra.mxu0 0.0
        %1048 = vmatprep.subr.mxu0 0.0
        %1049 = vmatpush1.msra.mxu0 0.0
        %1050 = vmatprep.subr.mxu0 0.0
        %1051 = vmatpush1.msra.mxu0 0.0
        %1052 = vmatprep.subr.mxu0 0.0
        %1053 = vmatpush1.msra.mxu0 0.0
        %1054 = vmatprep.subr.mxu0 0.0
        %1055 = vmatpush1.msra.mxu0 0.0
        %1056 = vmatprep.subr.mxu0 0.0
        %1057 = vmatpush1.msra.mxu0 0.0
        %1058 = vmatprep.mubr.f32.mxu0 0.0
        %1059 = vmatmul.mubr.f32.gmra.mrb[0].mxu0 %v992
        %v1060 = vpop.f32.mrb[0].mxu0
        %v1061 = vadd.f32 0.0, %v1060
        %v1062 = vpop.f32.mrb[0].mxu0
        %1063 = vdwg.mxu0
        %v1065 = vsel %vm899, %v964, 0
        %1067 = vmatprep.subr.mxu0 0.0
        %1068 = vmatpush1.msra.mxu0 %v971
        %1069 = vmatprep.subr.mxu0 0.0
        %1070 = vmatpush1.msra.mxu0 %v972
        %1071 = vmatprep.subr.mxu0 0.0
        %1072 = vmatpush1.msra.mxu0 %v973
        %1073 = vmatprep.subr.mxu0 0.0
        %1074 = vmatpush1.msra.mxu0 %v974
        %1075 = vmatprep.subr.mxu0 0.0
        %1076 = vmatpush1.msra.mxu0 %v975
        %1077 = vmatprep.subr.mxu0 0.0
        %1078 = vmatpush1.msra.mxu0 %v976
        %1079 = vmatprep.subr.mxu0 0.0
        %1080 = vmatpush1.msra.mxu0 0.0
        %1081 = vmatprep.subr.mxu0 0.0
        %1082 = vmatpush1.msra.mxu0 0.0
        %1083 = vmatprep.subr.mxu0 0.0
        %1084 = vmatpush1.msra.mxu0 0.0
        %1085 = vmatprep.subr.mxu0 0.0
        %1086 = vmatpush1.msra.mxu0 0.0
        %1087 = vmatprep.subr.mxu0 0.0
        %1088 = vmatpush1.msra.mxu0 0.0
        %1089 = vmatprep.subr.mxu0 0.0
        %1090 = vmatpush1.msra.mxu0 0.0
        %1091 = vmatprep.subr.mxu0 0.0
        %1092 = vmatpush1.msra.mxu0 0.0
        %1093 = vmatprep.subr.mxu0 0.0
        %1094 = vmatpush1.msra.mxu0 0.0
        %1095 = vmatprep.subr.mxu0 0.0
        %1096 = vmatpush1.msra.mxu0 0.0
        %1097 = vmatprep.subr.mxu0 0.0
        %1098 = vmatpush1.msra.mxu0 0.0
        %1099 = vmatprep.subr.mxu0 0.0
        %1100 = vmatpush1.msra.mxu0 0.0
        %1101 = vmatprep.subr.mxu0 0.0
        %1102 = vmatpush1.msra.mxu0 0.0
        %1103 = vmatprep.subr.mxu0 0.0
        %1104 = vmatpush1.msra.mxu0 0.0
        %1105 = vmatprep.subr.mxu0 0.0
        %1106 = vmatpush1.msra.mxu0 0.0
        %1107 = vmatprep.subr.mxu0 0.0
        %1108 = vmatpush1.msra.mxu0 0.0
        %1109 = vmatprep.subr.mxu0 0.0
        %1110 = vmatpush1.msra.mxu0 0.0
        %1111 = vmatprep.subr.mxu0 0.0
        %1112 = vmatpush1.msra.mxu0 0.0
        %1113 = vmatprep.subr.mxu0 0.0
        %1114 = vmatpush1.msra.mxu0 0.0
        %1115 = vmatprep.subr.mxu0 0.0
        %1116 = vmatpush1.msra.mxu0 0.0
        %1117 = vmatprep.subr.mxu0 0.0
        %1118 = vmatpush1.msra.mxu0 0.0
        %1119 = vmatprep.subr.mxu0 0.0
        %1120 = vmatpush1.msra.mxu0 0.0
        %1121 = vmatprep.subr.mxu0 0.0
        %1122 = vmatpush1.msra.mxu0 0.0
        %1123 = vmatprep.subr.mxu0 0.0
        %1124 = vmatpush1.msra.mxu0 0.0
        %1125 = vmatprep.subr.mxu0 0.0
        %1126 = vmatpush1.msra.mxu0 0.0
        %1127 = vmatprep.subr.mxu0 0.0
        %1128 = vmatpush1.msra.mxu0 0.0
        %1129 = vmatprep.subr.mxu0 0.0
        %1130 = vmatpush1.msra.mxu0 0.0
        %1131 = vmatprep.mubr.f32.mxu0 0.0
        %1132 = vmatmul.mubr.f32.gmra.mrb[0].mxu0 %v1065
        %v1133 = vpop.f32.mrb[0].mxu0
        %v1134 = vadd.f32 %v1061, %v1133
        %v1135 = vpop.f32.mrb[0].mxu0
        %1136 = vdwg.mxu0
        %v1137 = vld [vmem:[#allocation2 + $0x2] sm:$0xff]
        %s1138 = scalar_lea.vmem [#allocation8], 48
        %v1139 = vld [vmem:[%s1138] sm:$0xf]
        %v1140 = vld [vmem:[%s1138 + $0x4] sm:$0xf]
        %v1141 = vld [vmem:[%s1138 + $0x8] sm:$0xf]
        %v1142 = vld [vmem:[%s1138 + $0xc] sm:$0xf]
        %v1143 = vld [vmem:[%s1138 + $0x10] sm:$0xf]
        %v1144 = vld [vmem:[%s1138 + $0x14] sm:$0xf]
        %v1145 = vunpack.c.l.bf16 %v1139
        %v1146 = vunpack.c.l.bf16 %v1140
        %v1147 = vunpack.c.l.bf16 %v1141
        %v1148 = vunpack.c.l.bf16 %v1142
        %v1149 = vunpack.c.l.bf16 %v1143
        %v1150 = vunpack.c.l.bf16 %v1144
        %v1152 = vsel %vm899, %v1137, 0
        %1154 = vmatprep.subr.mxu0 0.0
        %1155 = vmatpush1.msra.mxu0 %v1145
        %1156 = vmatprep.subr.mxu0 0.0
        %1157 = vmatpush1.msra.mxu0 %v1146
        %1158 = vmatprep.subr.mxu0 0.0
        %1159 = vmatpush1.msra.mxu0 %v1147
        %1160 = vmatprep.subr.mxu0 0.0
        %1161 = vmatpush1.msra.mxu0 %v1148
        %1162 = vmatprep.subr.mxu0 0.0
        %1163 = vmatpush1.msra.mxu0 %v1149
        %1164 = vmatprep.subr.mxu0 0.0
        %1165 = vmatpush1.msra.mxu0 %v1150
        %1166 = vmatprep.subr.mxu0 0.0
        %1167 = vmatpush1.msra.mxu0 0.0
        %1168 = vmatprep.subr.mxu0 0.0
        %1169 = vmatpush1.msra.mxu0 0.0
        %1170 = vmatprep.subr.mxu0 0.0
        %1171 = vmatpush1.msra.mxu0 0.0
        %1172 = vmatprep.subr.mxu0 0.0
        %1173 = vmatpush1.msra.mxu0 0.0
        %1174 = vmatprep.subr.mxu0 0.0
        %1175 = vmatpush1.msra.mxu0 0.0
        %1176 = vmatprep.subr.mxu0 0.0
        %1177 = vmatpush1.msra.mxu0 0.0
        %1178 = vmatprep.subr.mxu0 0.0
        %1179 = vmatpush1.msra.mxu0 0.0
        %1180 = vmatprep.subr.mxu0 0.0
        %1181 = vmatpush1.msra.mxu0 0.0
        %1182 = vmatprep.subr.mxu0 0.0
        %1183 = vmatpush1.msra.mxu0 0.0
        %1184 = vmatprep.subr.mxu0 0.0
        %1185 = vmatpush1.msra.mxu0 0.0
        %1186 = vmatprep.subr.mxu0 0.0
        %1187 = vmatpush1.msra.mxu0 0.0
        %1188 = vmatprep.subr.mxu0 0.0
        %1189 = vmatpush1.msra.mxu0 0.0
        %1190 = vmatprep.subr.mxu0 0.0
        %1191 = vmatpush1.msra.mxu0 0.0
        %1192 = vmatprep.subr.mxu0 0.0
        %1193 = vmatpush1.msra.mxu0 0.0
        %1194 = vmatprep.subr.mxu0 0.0
        %1195 = vmatpush1.msra.mxu0 0.0
        %1196 = vmatprep.subr.mxu0 0.0
        %1197 = vmatpush1.msra.mxu0 0.0
        %1198 = vmatprep.subr.mxu0 0.0
        %1199 = vmatpush1.msra.mxu0 0.0
        %1200 = vmatprep.subr.mxu0 0.0
        %1201 = vmatpush1.msra.mxu0 0.0
        %1202 = vmatprep.subr.mxu0 0.0
        %1203 = vmatpush1.msra.mxu0 0.0
        %1204 = vmatprep.subr.mxu0 0.0
        %1205 = vmatpush1.msra.mxu0 0.0
        %1206 = vmatprep.subr.mxu0 0.0
        %1207 = vmatpush1.msra.mxu0 0.0
        %1208 = vmatprep.subr.mxu0 0.0
        %1209 = vmatpush1.msra.mxu0 0.0
        %1210 = vmatprep.subr.mxu0 0.0
        %1211 = vmatpush1.msra.mxu0 0.0
        %1212 = vmatprep.subr.mxu0 0.0
        %1213 = vmatpush1.msra.mxu0 0.0
        %1214 = vmatprep.subr.mxu0 0.0
        %1215 = vmatpush1.msra.mxu0 0.0
        %1216 = vmatprep.subr.mxu0 0.0
        %1217 = vmatpush1.msra.mxu0 0.0
        %1218 = vmatprep.mubr.f32.mxu0 0.0
        %1219 = vmatmul.mubr.f32.gmra.mrb[0].mxu0 %v1152
        %v1220 = vpop.f32.mrb[0].mxu0
        %v1221 = vadd.f32 0.0, %v1220
        %v1222 = vpop.f32.mrb[0].mxu0
        %1223 = vdwg.mxu0
        %v1224 = vadd.f32 %v1134, %v1221
        %v1225 = vld [vmem:[#allocation2 + $0x3] sm:$0xff]
        %s1226 = scalar_lea.vmem [#allocation8], 72
        %v1227 = vld [vmem:[%s1226] sm:$0xf]
        %v1228 = vld [vmem:[%s1226 + $0x4] sm:$0xf]
        %v1229 = vld [vmem:[%s1226 + $0x8] sm:$0xf]
        %v1230 = vld [vmem:[%s1226 + $0xc] sm:$0xf]
        %v1231 = vld [vmem:[%s1226 + $0x10] sm:$0xf]
        %v1232 = vld [vmem:[%s1226 + $0x14] sm:$0xf]
        %v1233 = vunpack.c.l.bf16 %v1227
        %v1234 = vunpack.c.l.bf16 %v1228
        %v1235 = vunpack.c.l.bf16 %v1229
        %v1236 = vunpack.c.l.bf16 %v1230
        %v1237 = vunpack.c.l.bf16 %v1231
        %v1238 = vunpack.c.l.bf16 %v1232
        %v1240 = vsel %vm899, %v1225, 0
        %1242 = vmatprep.subr.mxu0 0.0
        %1243 = vmatpush1.msra.mxu0 %v1233
        %1244 = vmatprep.subr.mxu0 0.0
        %1245 = vmatpush1.msra.mxu0 %v1234
        %1246 = vmatprep.subr.mxu0 0.0
        %1247 = vmatpush1.msra.mxu0 %v1235
        %1248 = vmatprep.subr.mxu0 0.0
        %1249 = vmatpush1.msra.mxu0 %v1236
        %1250 = vmatprep.subr.mxu0 0.0
        %1251 = vmatpush1.msra.mxu0 %v1237
        %1252 = vmatprep.subr.mxu0 0.0
        %1253 = vmatpush1.msra.mxu0 %v1238
        %1254 = vmatprep.subr.mxu0 0.0
        %1255 = vmatpush1.msra.mxu0 0.0
        %1256 = vmatprep.subr.mxu0 0.0
        %1257 = vmatpush1.msra.mxu0 0.0
        %1258 = vmatprep.subr.mxu0 0.0
        %1259 = vmatpush1.msra.mxu0 0.0
        %1260 = vmatprep.subr.mxu0 0.0
        %1261 = vmatpush1.msra.mxu0 0.0
        %1262 = vmatprep.subr.mxu0 0.0
        %1263 = vmatpush1.msra.mxu0 0.0
        %1264 = vmatprep.subr.mxu0 0.0
        %1265 = vmatpush1.msra.mxu0 0.0
        %1266 = vmatprep.subr.mxu0 0.0
        %1267 = vmatpush1.msra.mxu0 0.0
        %1268 = vmatprep.subr.mxu0 0.0
        %1269 = vmatpush1.msra.mxu0 0.0
        %1270 = vmatprep.subr.mxu0 0.0
        %1271 = vmatpush1.msra.mxu0 0.0
        %1272 = vmatprep.subr.mxu0 0.0
        %1273 = vmatpush1.msra.mxu0 0.0
        %1274 = vmatprep.subr.mxu0 0.0
        %1275 = vmatpush1.msra.mxu0 0.0
        %1276 = vmatprep.subr.mxu0 0.0
        %1277 = vmatpush1.msra.mxu0 0.0
        %1278 = vmatprep.subr.mxu0 0.0
        %1279 = vmatpush1.msra.mxu0 0.0
        %1280 = vmatprep.subr.mxu0 0.0
        %1281 = vmatpush1.msra.mxu0 0.0
        %1282 = vmatprep.subr.mxu0 0.0
        %1283 = vmatpush1.msra.mxu0 0.0
        %1284 = vmatprep.subr.mxu0 0.0
        %1285 = vmatpush1.msra.mxu0 0.0
        %1286 = vmatprep.subr.mxu0 0.0
        %1287 = vmatpush1.msra.mxu0 0.0
        %1288 = vmatprep.subr.mxu0 0.0
        %1289 = vmatpush1.msra.mxu0 0.0
        %1290 = vmatprep.subr.mxu0 0.0
        %1291 = vmatpush1.msra.mxu0 0.0
        %1292 = vmatprep.subr.mxu0 0.0
        %1293 = vmatpush1.msra.mxu0 0.0
        %1294 = vmatprep.subr.mxu0 0.0
        %1295 = vmatpush1.msra.mxu0 0.0
        %1296 = vmatprep.subr.mxu0 0.0
        %1297 = vmatpush1.msra.mxu0 0.0
        %1298 = vmatprep.subr.mxu0 0.0
        %1299 = vmatpush1.msra.mxu0 0.0
        %1300 = vmatprep.subr.mxu0 0.0
        %1301 = vmatpush1.msra.mxu0 0.0
        %1302 = vmatprep.subr.mxu0 0.0
        %1303 = vmatpush1.msra.mxu0 0.0
        %1304 = vmatprep.subr.mxu0 0.0
        %1305 = vmatpush1.msra.mxu0 0.0
        %1306 = vmatprep.mubr.f32.mxu0 0.0
        %1307 = vmatmul.mubr.f32.gmra.mrb[0].mxu0 %v1240
        %v1308 = vpop.f32.mrb[0].mxu0
        %v1309 = vadd.f32 0.0, %v1308
        %v1310 = vpop.f32.mrb[0].mxu0
        %1311 = vdwg.mxu0
        %v1312 = vadd.f32 %v1224, %v1309
        %v1313 = vld [vmem:[#allocation2 + $0x4] sm:$0xff]
        %s1314 = scalar_lea.vmem [#allocation8], 96
        %v1315 = vld [vmem:[%s1314] sm:$0xf]
        %v1316 = vld [vmem:[%s1314 + $0x4] sm:$0xf]
        %v1317 = vld [vmem:[%s1314 + $0x8] sm:$0xf]
        %v1318 = vld [vmem:[%s1314 + $0xc] sm:$0xf]
        %v1319 = vld [vmem:[%s1314 + $0x10] sm:$0xf]
        %v1320 = vld [vmem:[%s1314 + $0x14] sm:$0xf]
        %v1321 = vunpack.c.l.bf16 %v1315
        %v1322 = vunpack.c.l.bf16 %v1316
        %v1323 = vunpack.c.l.bf16 %v1317
        %v1324 = vunpack.c.l.bf16 %v1318
        %v1325 = vunpack.c.l.bf16 %v1319
        %v1326 = vunpack.c.l.bf16 %v1320
        %v1328 = vsel %vm899, %v1313, 0
        %1330 = vmatprep.subr.mxu0 0.0
        %1331 = vmatpush1.msra.mxu0 %v1321
        %1332 = vmatprep.subr.mxu0 0.0
        %1333 = vmatpush1.msra.mxu0 %v1322
        %1334 = vmatprep.subr.mxu0 0.0
        %1335 = vmatpush1.msra.mxu0 %v1323
        %1336 = vmatprep.subr.mxu0 0.0
        %1337 = vmatpush1.msra.mxu0 %v1324
        %1338 = vmatprep.subr.mxu0 0.0
        %1339 = vmatpush1.msra.mxu0 %v1325
        %1340 = vmatprep.subr.mxu0 0.0
        %1341 = vmatpush1.msra.mxu0 %v1326
        %1342 = vmatprep.subr.mxu0 0.0
        %1343 = vmatpush1.msra.mxu0 0.0
        %1344 = vmatprep.subr.mxu0 0.0
        %1345 = vmatpush1.msra.mxu0 0.0
        %1346 = vmatprep.subr.mxu0 0.0
        %1347 = vmatpush1.msra.mxu0 0.0
        %1348 = vmatprep.subr.mxu0 0.0
        %1349 = vmatpush1.msra.mxu0 0.0
        %1350 = vmatprep.subr.mxu0 0.0
        %1351 = vmatpush1.msra.mxu0 0.0
        %1352 = vmatprep.subr.mxu0 0.0
        %1353 = vmatpush1.msra.mxu0 0.0
        %1354 = vmatprep.subr.mxu0 0.0
        %1355 = vmatpush1.msra.mxu0 0.0
        %1356 = vmatprep.subr.mxu0 0.0
        %1357 = vmatpush1.msra.mxu0 0.0
        %1358 = vmatprep.subr.mxu0 0.0
        %1359 = vmatpush1.msra.mxu0 0.0
        %1360 = vmatprep.subr.mxu0 0.0
        %1361 = vmatpush1.msra.mxu0 0.0
        %1362 = vmatprep.subr.mxu0 0.0
        %1363 = vmatpush1.msra.mxu0 0.0
        %1364 = vmatprep.subr.mxu0 0.0
        %1365 = vmatpush1.msra.mxu0 0.0
        %1366 = vmatprep.subr.mxu0 0.0
        %1367 = vmatpush1.msra.mxu0 0.0
        %1368 = vmatprep.subr.mxu0 0.0
        %1369 = vmatpush1.msra.mxu0 0.0
        %1370 = vmatprep.subr.mxu0 0.0
        %1371 = vmatpush1.msra.mxu0 0.0
        %1372 = vmatprep.subr.mxu0 0.0
        %1373 = vmatpush1.msra.mxu0 0.0
        %1374 = vmatprep.subr.mxu0 0.0
        %1375 = vmatpush1.msra.mxu0 0.0
        %1376 = vmatprep.subr.mxu0 0.0
        %1377 = vmatpush1.msra.mxu0 0.0
        %1378 = vmatprep.subr.mxu0 0.0
        %1379 = vmatpush1.msra.mxu0 0.0
        %1380 = vmatprep.subr.mxu0 0.0
        %1381 = vmatpush1.msra.mxu0 0.0
        %1382 = vmatprep.subr.mxu0 0.0
        %1383 = vmatpush1.msra.mxu0 0.0
        %1384 = vmatprep.subr.mxu0 0.0
        %1385 = vmatpush1.msra.mxu0 0.0
        %1386 = vmatprep.subr.mxu0 0.0
        %1387 = vmatpush1.msra.mxu0 0.0
        %1388 = vmatprep.subr.mxu0 0.0
        %1389 = vmatpush1.msra.mxu0 0.0
        %1390 = vmatprep.subr.mxu0 0.0
        %1391 = vmatpush1.msra.mxu0 0.0
        %1392 = vmatprep.subr.mxu0 0.0
        %1393 = vmatpush1.msra.mxu0 0.0
        %1394 = vmatprep.mubr.f32.mxu0 0.0
        %1395 = vmatmul.mubr.f32.gmra.mrb[0].mxu0 %v1328
        %v1396 = vpop.f32.mrb[0].mxu0
        %v1397 = vadd.f32 0.0, %v1396
        %v1398 = vpop.f32.mrb[0].mxu0
        %1399 = vdwg.mxu0
        %v1400 = vadd.f32 %v1312, %v1397
        %vm1401 = vcmask 523264
        %v1402 = vsel %vm1401, %v1400, 0.0
        %1403 = vadd.xlane.f32.xlu0 %v1402
        %v1404 = vpop.xlane.xlu0 %1403
        %v1405 = vrot.slane %v1404, 4
        %v1406 = vadd.f32 %v1404, %v1405
        %v1407 = vrot.slane %v1406, 2
        %v1408 = vadd.f32 %v1406, %v1407
        %v1409 = vrot.slane %v1408, 1
        %v1410 = vadd.f32 %v1408, %v1409
        %v1411 = vmul.f32 %v1410, 0.001953125
        %v1412 = vsub.f32 %v1400, %v1411
        %v1413 = vmul.f32 %v1412, %v1412
        %v1414 = vsel %vm1401, %v1413, 0.0
        %1415 = vadd.xlane.f32.xlu0 %v1414
        %v1416 = vpop.xlane.xlu0 %1415
        %v1417 = vrot.slane %v1416, 4
        %v1418 = vadd.f32 %v1416, %v1417
        %v1419 = vrot.slane %v1418, 2
        %v1420 = vadd.f32 %v1418, %v1419
        %v1421 = vrot.slane %v1420, 1
        %v1422 = vadd.f32 %v1420, %v1421
        %v1423 = vmul.f32 %v1422, 0.001953125
        %v1424 = vadd.f32 %v1423, 1e-05
        %v1425 = vrsqrt.pop %v1424
        %v1426 = vmul.f32 %v1412, %v1425
        %v1427 = vld [vmem:[%s5] sm:$0x1]
        %v1429 = vlaneseq
        %v1430 = vshrl.u32 %v1429, 7
        %v1431 = vsub.s32 0, %v1430
        %v1432 = vrot.slane %v1427, %v1431
        %v1434 = vmul.f32 %v1426, %v1432
        %v1435 = vld [vmem:[%s6] sm:$0x1]
        %v1437 = vlaneseq
        %v1438 = vshrl.u32 %v1437, 7
        %v1439 = vsub.s32 0, %v1438
        %v1440 = vrot.slane %v1435, %v1439
        %v1442 = vadd.f32 %v1434, %v1440
        %v1443 = vmul.f32 %v1442, 0.01
        %v1444 = vmax.f32 %v1442, %v1443
        %1445 = vst.msk [vmem:[#allocation2] sm:$0xff] %vm1401, %v1444
        %v1446 = vld [vmem:[#allocation2] sm:$0xf]
        %v1447 = vld [vmem:[#allocation9] sm:$0xf]
        %v1448 = vld [vmem:[#allocation9 + $0x4] sm:$0xf]
        %v1449 = vld [vmem:[#allocation9 + $0x8] sm:$0xf]
        %v1450 = vld [vmem:[#allocation9 + $0xc] sm:$0xf]
        %v1451 = vld [vmem:[#allocation9 + $0x10] sm:$0xf]
        %v1452 = vld [vmem:[#allocation9 + $0x14] sm:$0xf]
        %v1453 = vld [vmem:[#allocation9 + $0x18] sm:$0xf]
        %v1454 = vld [vmem:[#allocation9 + $0x1c] sm:$0xf]
        %v1455 = vunpack.c.l.bf16 %v1447
        %v1456 = vunpack.c.l.bf16 %v1448
        %v1457 = vunpack.c.l.bf16 %v1449
        %v1458 = vunpack.c.l.bf16 %v1450
        %v1459 = vunpack.c.l.bf16 %v1451
        %v1460 = vunpack.c.l.bf16 %v1452
        %v1461 = vunpack.c.l.bf16 %v1453
        %v1462 = vunpack.c.l.bf16 %v1454
        %v1463 = vld [vmem:[#allocation2 + $0x1] sm:$0xf]
        %s1464 = scalar_lea.vmem [#allocation9], 32
        %v1465 = vld [vmem:[%s1464] sm:$0xf]
        %v1466 = vld [vmem:[%s1464 + $0x4] sm:$0xf]
        %v1467 = vld [vmem:[%s1464 + $0x8] sm:$0xf]
        %v1468 = vld [vmem:[%s1464 + $0xc] sm:$0xf]
        %v1469 = vld [vmem:[%s1464 + $0x10] sm:$0xf]
        %v1470 = vld [vmem:[%s1464 + $0x14] sm:$0xf]
        %v1471 = vld [vmem:[%s1464 + $0x18] sm:$0xf]
        %v1472 = vld [vmem:[%s1464 + $0x1c] sm:$0xf]
        %v1473 = vunpack.c.l.bf16 %v1465
        %v1474 = vunpack.c.l.bf16 %v1466
        %v1475 = vunpack.c.l.bf16 %v1467
        %v1476 = vunpack.c.l.bf16 %v1468
        %v1477 = vunpack.c.l.bf16 %v1469
        %v1478 = vunpack.c.l.bf16 %v1470
        %v1479 = vunpack.c.l.bf16 %v1471
        %v1480 = vunpack.c.l.bf16 %v1472
        %v1482 = vsel %vm1401, %v1463, 0
        %1484 = vmatprep.subr.mxu0 0.0
        %1485 = vmatpush1.msra.mxu0 %v1473
        %1486 = vmatprep.subr.mxu0 0.0
        %1487 = vmatpush1.msra.mxu0 %v1474
        %1488 = vmatprep.subr.mxu0 0.0
        %1489 = vmatpush1.msra.mxu0 %v1475
        %1490 = vmatprep.subr.mxu0 0.0
        %1491 = vmatpush1.msra.mxu0 %v1476
        %1492 = vmatprep.subr.mxu0 0.0
        %1493 = vmatpush1.msra.mxu0 %v1477
        %1494 = vmatprep.subr.mxu0 0.0
        %1495 = vmatpush1.msra.mxu0 %v1478
        %1496 = vmatprep.subr.mxu0 0.0
        %1497 = vmatpush1.msra.mxu0 %v1479
        %1498 = vmatprep.subr.mxu0 0.0
        %1499 = vmatpush1.msra.mxu0 %v1480
        %1500 = vmatprep.subr.mxu0 0.0
        %1501 = vmatpush1.msra.mxu0 0.0
        %1502 = vmatprep.subr.mxu0 0.0
        %1503 = vmatpush1.msra.mxu0 0.0
        %1504 = vmatprep.subr.mxu0 0.0
        %1505 = vmatpush1.msra.mxu0 0.0
        %1506 = vmatprep.subr.mxu0 0.0
        %1507 = vmatpush1.msra.mxu0 0.0
        %1508 = vmatprep.subr.mxu0 0.0
        %1509 = vmatpush1.msra.mxu0 0.0
        %1510 = vmatprep.subr.mxu0 0.0
        %1511 = vmatpush1.msra.mxu0 0.0
        %1512 = vmatprep.subr.mxu0 0.0
        %1513 = vmatpush1.msra.mxu0 0.0
        %1514 = vmatprep.subr.mxu0 0.0
        %1515 = vmatpush1.msra.mxu0 0.0
        %1516 = vmatprep.subr.mxu0 0.0
        %1517 = vmatpush1.msra.mxu0 0.0
        %1518 = vmatprep.subr.mxu0 0.0
        %1519 = vmatpush1.msra.mxu0 0.0
        %1520 = vmatprep.subr.mxu0 0.0
        %1521 = vmatpush1.msra.mxu0 0.0
        %1522 = vmatprep.subr.mxu0 0.0
        %1523 = vmatpush1.msra.mxu0 0.0
        %1524 = vmatprep.subr.mxu0 0.0
        %1525 = vmatpush1.msra.mxu0 0.0
        %1526 = vmatprep.subr.mxu0 0.0
        %1527 = vmatpush1.msra.mxu0 0.0
        %1528 = vmatprep.subr.mxu0 0.0
        %1529 = vmatpush1.msra.mxu0 0.0
        %1530 = vmatprep.subr.mxu0 0.0
        %1531 = vmatpush1.msra.mxu0 0.0
        %1532 = vmatprep.subr.mxu0 0.0
        %1533 = vmatpush1.msra.mxu0 0.0
        %1534 = vmatprep.subr.mxu0 0.0
        %1535 = vmatpush1.msra.mxu0 0.0
        %1536 = vmatprep.subr.mxu0 0.0
        %1537 = vmatpush1.msra.mxu0 0.0
        %1538 = vmatprep.subr.mxu0 0.0
        %1539 = vmatpush1.msra.mxu0 0.0
        %1540 = vmatprep.subr.mxu0 0.0
        %1541 = vmatpush1.msra.mxu0 0.0
        %1542 = vmatprep.subr.mxu0 0.0
        %1543 = vmatpush1.msra.mxu0 0.0
        %1544 = vmatprep.subr.mxu0 0.0
        %1545 = vmatpush1.msra.mxu0 0.0
        %1546 = vmatprep.subr.mxu0 0.0
        %1547 = vmatpush1.msra.mxu0 0.0
        %1548 = vmatprep.mubr.f32.mxu0 0.0
        %1549 = vmatmul.mubr.f32.gmra.mrb[0].mxu0 %v1482
        %v1550 = vpop.f32.mrb[0].mxu0
        %v1551 = vadd.f32 0.0, %v1550
        %v1552 = vpop.f32.mrb[0].mxu0
        %1553 = vdwg.mxu0
        %v1555 = vsel %vm1401, %v1446, 0
        %1557 = vmatprep.subr.mxu0 0.0
        %1558 = vmatpush1.msra.mxu0 %v1455
        %1559 = vmatprep.subr.mxu0 0.0
        %1560 = vmatpush1.msra.mxu0 %v1456
        %1561 = vmatprep.subr.mxu0 0.0
        %1562 = vmatpush1.msra.mxu0 %v1457
        %1563 = vmatprep.subr.mxu0 0.0
        %1564 = vmatpush1.msra.mxu0 %v1458
        %1565 = vmatprep.subr.mxu0 0.0
        %1566 = vmatpush1.msra.mxu0 %v1459
        %1567 = vmatprep.subr.mxu0 0.0
        %1568 = vmatpush1.msra.mxu0 %v1460
        %1569 = vmatprep.subr.mxu0 0.0
        %1570 = vmatpush1.msra.mxu0 %v1461
        %1571 = vmatprep.subr.mxu0 0.0
        %1572 = vmatpush1.msra.mxu0 %v1462
        %1573 = vmatprep.subr.mxu0 0.0
        %1574 = vmatpush1.msra.mxu0 0.0
        %1575 = vmatprep.subr.mxu0 0.0
        %1576 = vmatpush1.msra.mxu0 0.0
        %1577 = vmatprep.subr.mxu0 0.0
        %1578 = vmatpush1.msra.mxu0 0.0
        %1579 = vmatprep.subr.mxu0 0.0
        %1580 = vmatpush1.msra.mxu0 0.0
        %1581 = vmatprep.subr.mxu0 0.0
        %1582 = vmatpush1.msra.mxu0 0.0
        %1583 = vmatprep.subr.mxu0 0.0
        %1584 = vmatpush1.msra.mxu0 0.0
        %1585 = vmatprep.subr.mxu0 0.0
        %1586 = vmatpush1.msra.mxu0 0.0
        %1587 = vmatprep.subr.mxu0 0.0
        %1588 = vmatpush1.msra.mxu0 0.0
        %1589 = vmatprep.subr.mxu0 0.0
        %1590 = vmatpush1.msra.mxu0 0.0
        %1591 = vmatprep.subr.mxu0 0.0
        %1592 = vmatpush1.msra.mxu0 0.0
        %1593 = vmatprep.subr.mxu0 0.0
        %1594 = vmatpush1.msra.mxu0 0.0
        %1595 = vmatprep.subr.mxu0 0.0
        %1596 = vmatpush1.msra.mxu0 0.0
        %1597 = vmatprep.subr.mxu0 0.0
        %1598 = vmatpush1.msra.mxu0 0.0
        %1599 = vmatprep.subr.mxu0 0.0
        %1600 = vmatpush1.msra.mxu0 0.0
        %1601 = vmatprep.subr.mxu0 0.0
        %1602 = vmatpush1.msra.mxu0 0.0
        %1603 = vmatprep.subr.mxu0 0.0
        %1604 = vmatpush1.msra.mxu0 0.0
        %1605 = vmatprep.subr.mxu0 0.0
        %1606 = vmatpush1.msra.mxu0 0.0
        %1607 = vmatprep.subr.mxu0 0.0
        %1608 = vmatpush1.msra.mxu0 0.0
        %1609 = vmatprep.subr.mxu0 0.0
        %1610 = vmatpush1.msra.mxu0 0.0
        %1611 = vmatprep.subr.mxu0 0.0
        %1612 = vmatpush1.msra.mxu0 0.0
        %1613 = vmatprep.subr.mxu0 0.0
        %1614 = vmatpush1.msra.mxu0 0.0
        %1615 = vmatprep.subr.mxu0 0.0
        %1616 = vmatpush1.msra.mxu0 0.0
        %1617 = vmatprep.subr.mxu0 0.0
        %1618 = vmatpush1.msra.mxu0 0.0
        %1619 = vmatprep.subr.mxu0 0.0
        %1620 = vmatpush1.msra.mxu0 0.0
        %1621 = vmatprep.mubr.f32.mxu0 0.0
        %1622 = vmatmul.mubr.f32.gmra.mrb[0].mxu0 %v1555
        %v1623 = vpop.f32.mrb[0].mxu0
        %v1624 = vadd.f32 %v1551, %v1623
        %v1625 = vpop.f32.mrb[0].mxu0
        %1626 = vdwg.mxu0
        %v1627 = vld [vmem:[#allocation2 + $0x2] sm:$0xf]
        %s1628 = scalar_lea.vmem [#allocation9], 64
        %v1629 = vld [vmem:[%s1628] sm:$0xf]
        %v1630 = vld [vmem:[%s1628 + $0x4] sm:$0xf]
        %v1631 = vld [vmem:[%s1628 + $0x8] sm:$0xf]
        %v1632 = vld [vmem:[%s1628 + $0xc] sm:$0xf]
        %v1633 = vld [vmem:[%s1628 + $0x10] sm:$0xf]
        %v1634 = vld [vmem:[%s1628 + $0x14] sm:$0xf]
        %v1635 = vld [vmem:[%s1628 + $0x18] sm:$0xf]
        %v1636 = vld [vmem:[%s1628 + $0x1c] sm:$0xf]
        %v1637 = vunpack.c.l.bf16 %v1629
        %v1638 = vunpack.c.l.bf16 %v1630
        %v1639 = vunpack.c.l.bf16 %v1631
        %v1640 = vunpack.c.l.bf16 %v1632
        %v1641 = vunpack.c.l.bf16 %v1633
        %v1642 = vunpack.c.l.bf16 %v1634
        %v1643 = vunpack.c.l.bf16 %v1635
        %v1644 = vunpack.c.l.bf16 %v1636
        %v1646 = vsel %vm1401, %v1627, 0
        %1648 = vmatprep.subr.mxu0 0.0
        %1649 = vmatpush1.msra.mxu0 %v1637
        %1650 = vmatprep.subr.mxu0 0.0
        %1651 = vmatpush1.msra.mxu0 %v1638
        %1652 = vmatprep.subr.mxu0 0.0
        %1653 = vmatpush1.msra.mxu0 %v1639
        %1654 = vmatprep.subr.mxu0 0.0
        %1655 = vmatpush1.msra.mxu0 %v1640
        %1656 = vmatprep.subr.mxu0 0.0
        %1657 = vmatpush1.msra.mxu0 %v1641
        %1658 = vmatprep.subr.mxu0 0.0
        %1659 = vmatpush1.msra.mxu0 %v1642
        %1660 = vmatprep.subr.mxu0 0.0
        %1661 = vmatpush1.msra.mxu0 %v1643
        %1662 = vmatprep.subr.mxu0 0.0
        %1663 = vmatpush1.msra.mxu0 %v1644
        %1664 = vmatprep.subr.mxu0 0.0
        %1665 = vmatpush1.msra.mxu0 0.0
        %1666 = vmatprep.subr.mxu0 0.0
        %1667 = vmatpush1.msra.mxu0 0.0
        %1668 = vmatprep.subr.mxu0 0.0
        %1669 = vmatpush1.msra.mxu0 0.0
        %1670 = vmatprep.subr.mxu0 0.0
        %1671 = vmatpush1.msra.mxu0 0.0
        %1672 = vmatprep.subr.mxu0 0.0
        %1673 = vmatpush1.msra.mxu0 0.0
        %1674 = vmatprep.subr.mxu0 0.0
        %1675 = vmatpush1.msra.mxu0 0.0
        %1676 = vmatprep.subr.mxu0 0.0
        %1677 = vmatpush1.msra.mxu0 0.0
        %1678 = vmatprep.subr.mxu0 0.0
        %1679 = vmatpush1.msra.mxu0 0.0
        %1680 = vmatprep.subr.mxu0 0.0
        %1681 = vmatpush1.msra.mxu0 0.0
        %1682 = vmatprep.subr.mxu0 0.0
        %1683 = vmatpush1.msra.mxu0 0.0
        %1684 = vmatprep.subr.mxu0 0.0
        %1685 = vmatpush1.msra.mxu0 0.0
        %1686 = vmatprep.subr.mxu0 0.0
        %1687 = vmatpush1.msra.mxu0 0.0
        %1688 = vmatprep.subr.mxu0 0.0
        %1689 = vmatpush1.msra.mxu0 0.0
        %1690 = vmatprep.subr.mxu0 0.0
        %1691 = vmatpush1.msra.mxu0 0.0
        %1692 = vmatprep.subr.mxu0 0.0
        %1693 = vmatpush1.msra.mxu0 0.0
        %1694 = vmatprep.subr.mxu0 0.0
        %1695 = vmatpush1.msra.mxu0 0.0
        %1696 = vmatprep.subr.mxu0 0.0
        %1697 = vmatpush1.msra.mxu0 0.0
        %1698 = vmatprep.subr.mxu0 0.0
        %1699 = vmatpush1.msra.mxu0 0.0
        %1700 = vmatprep.subr.mxu0 0.0
        %1701 = vmatpush1.msra.mxu0 0.0
        %1702 = vmatprep.subr.mxu0 0.0
        %1703 = vmatpush1.msra.mxu0 0.0
        %1704 = vmatprep.subr.mxu0 0.0
        %1705 = vmatpush1.msra.mxu0 0.0
        %1706 = vmatprep.subr.mxu0 0.0
        %1707 = vmatpush1.msra.mxu0 0.0
        %1708 = vmatprep.subr.mxu0 0.0
        %1709 = vmatpush1.msra.mxu0 0.0
        %1710 = vmatprep.subr.mxu0 0.0
        %1711 = vmatpush1.msra.mxu0 0.0
        %1712 = vmatprep.mubr.f32.mxu0 0.0
        %1713 = vmatmul.mubr.f32.gmra.mrb[0].mxu0 %v1646
        %v1714 = vpop.f32.mrb[0].mxu0
        %v1715 = vadd.f32 0.0, %v1714
        %v1716 = vpop.f32.mrb[0].mxu0
        %1717 = vdwg.mxu0
        %v1718 = vadd.f32 %v1624, %v1715
        %v1719 = vld [vmem:[#allocation2 + $0x3] sm:$0xf]
        %s1720 = scalar_lea.vmem [#allocation9], 96
        %v1721 = vld [vmem:[%s1720] sm:$0xf]
        %v1722 = vld [vmem:[%s1720 + $0x4] sm:$0xf]
        %v1723 = vld [vmem:[%s1720 + $0x8] sm:$0xf]
        %v1724 = vld [vmem:[%s1720 + $0xc] sm:$0xf]
        %v1725 = vld [vmem:[%s1720 + $0x10] sm:$0xf]
        %v1726 = vld [vmem:[%s1720 + $0x14] sm:$0xf]
        %v1727 = vld [vmem:[%s1720 + $0x18] sm:$0xf]
        %v1728 = vld [vmem:[%s1720 + $0x1c] sm:$0xf]
        %v1729 = vunpack.c.l.bf16 %v1721
        %v1730 = vunpack.c.l.bf16 %v1722
        %v1731 = vunpack.c.l.bf16 %v1723
        %v1732 = vunpack.c.l.bf16 %v1724
        %v1733 = vunpack.c.l.bf16 %v1725
        %v1734 = vunpack.c.l.bf16 %v1726
        %v1735 = vunpack.c.l.bf16 %v1727
        %v1736 = vunpack.c.l.bf16 %v1728
        %v1738 = vsel %vm1401, %v1719, 0
        %1740 = vmatprep.subr.mxu0 0.0
        %1741 = vmatpush1.msra.mxu0 %v1729
        %1742 = vmatprep.subr.mxu0 0.0
        %1743 = vmatpush1.msra.mxu0 %v1730
        %1744 = vmatprep.subr.mxu0 0.0
        %1745 = vmatpush1.msra.mxu0 %v1731
        %1746 = vmatprep.subr.mxu0 0.0
        %1747 = vmatpush1.msra.mxu0 %v1732
        %1748 = vmatprep.subr.mxu0 0.0
        %1749 = vmatpush1.msra.mxu0 %v1733
        %1750 = vmatprep.subr.mxu0 0.0
        %1751 = vmatpush1.msra.mxu0 %v1734
        %1752 = vmatprep.subr.mxu0 0.0
        %1753 = vmatpush1.msra.mxu0 %v1735
        %1754 = vmatprep.subr.mxu0 0.0
        %1755 = vmatpush1.msra.mxu0 %v1736
        %1756 = vmatprep.subr.mxu0 0.0
        %1757 = vmatpush1.msra.mxu0 0.0
        %1758 = vmatprep.subr.mxu0 0.0
        %1759 = vmatpush1.msra.mxu0 0.0
        %1760 = vmatprep.subr.mxu0 0.0
        %1761 = vmatpush1.msra.mxu0 0.0
        %1762 = vmatprep.subr.mxu0 0.0
        %1763 = vmatpush1.msra.mxu0 0.0
        %1764 = vmatprep.subr.mxu0 0.0
        %1765 = vmatpush1.msra.mxu0 0.0
        %1766 = vmatprep.subr.mxu0 0.0
        %1767 = vmatpush1.msra.mxu0 0.0
        %1768 = vmatprep.subr.mxu0 0.0
        %1769 = vmatpush1.msra.mxu0 0.0
        %1770 = vmatprep.subr.mxu0 0.0
        %1771 = vmatpush1.msra.mxu0 0.0
        %1772 = vmatprep.subr.mxu0 0.0
        %1773 = vmatpush1.msra.mxu0 0.0
        %1774 = vmatprep.subr.mxu0 0.0
        %1775 = vmatpush1.msra.mxu0 0.0
        %1776 = vmatprep.subr.mxu0 0.0
        %1777 = vmatpush1.msra.mxu0 0.0
        %1778 = vmatprep.subr.mxu0 0.0
        %1779 = vmatpush1.msra.mxu0 0.0
        %1780 = vmatprep.subr.mxu0 0.0
        %1781 = vmatpush1.msra.mxu0 0.0
        %1782 = vmatprep.subr.mxu0 0.0
        %1783 = vmatpush1.msra.mxu0 0.0
        %1784 = vmatprep.subr.mxu0 0.0
        %1785 = vmatpush1.msra.mxu0 0.0
        %1786 = vmatprep.subr.mxu0 0.0
        %1787 = vmatpush1.msra.mxu0 0.0
        %1788 = vmatprep.subr.mxu0 0.0
        %1789 = vmatpush1.msra.mxu0 0.0
        %1790 = vmatprep.subr.mxu0 0.0
        %1791 = vmatpush1.msra.mxu0 0.0
        %1792 = vmatprep.subr.mxu0 0.0
        %1793 = vmatpush1.msra.mxu0 0.0
        %1794 = vmatprep.subr.mxu0 0.0
        %1795 = vmatpush1.msra.mxu0 0.0
        %1796 = vmatprep.subr.mxu0 0.0
        %1797 = vmatpush1.msra.mxu0 0.0
        %1798 = vmatprep.subr.mxu0 0.0
        %1799 = vmatpush1.msra.mxu0 0.0
        %1800 = vmatprep.subr.mxu0 0.0
        %1801 = vmatpush1.msra.mxu0 0.0
        %1802 = vmatprep.subr.mxu0 0.0
        %1803 = vmatpush1.msra.mxu0 0.0
        %1804 = vmatprep.mubr.f32.mxu0 0.0
        %1805 = vmatmul.mubr.f32.gmra.mrb[0].mxu0 %v1738
        %v1806 = vpop.f32.mrb[0].mxu0
        %v1807 = vadd.f32 0.0, %v1806
        %v1808 = vpop.f32.mrb[0].mxu0
        %1809 = vdwg.mxu0
        %v1810 = vadd.f32 %v1718, %v1807
        %v1811 = vld [vmem:[#allocation2 + $0x4] sm:$0xf]
        %s1812 = scalar_lea.vmem [#allocation9], 128
        %v1813 = vld [vmem:[%s1812] sm:$0xf]
        %v1814 = vld [vmem:[%s1812 + $0x4] sm:$0xf]
        %v1815 = vld [vmem:[%s1812 + $0x8] sm:$0xf]
        %v1816 = vld [vmem:[%s1812 + $0xc] sm:$0xf]
        %v1817 = vld [vmem:[%s1812 + $0x10] sm:$0xf]
        %v1818 = vld [vmem:[%s1812 + $0x14] sm:$0xf]
        %v1819 = vld [vmem:[%s1812 + $0x18] sm:$0xf]
        %v1820 = vld [vmem:[%s1812 + $0x1c] sm:$0xf]
        %v1821 = vunpack.c.l.bf16 %v1813
        %v1822 = vunpack.c.l.bf16 %v1814
        %v1823 = vunpack.c.l.bf16 %v1815
        %v1824 = vunpack.c.l.bf16 %v1816
        %v1825 = vunpack.c.l.bf16 %v1817
        %v1826 = vunpack.c.l.bf16 %v1818
        %v1827 = vunpack.c.l.bf16 %v1819
        %v1828 = vunpack.c.l.bf16 %v1820
        %v1830 = vsel %vm1401, %v1811, 0
        %1832 = vmatprep.subr.mxu0 0.0
        %1833 = vmatpush1.msra.mxu0 %v1821
        %1834 = vmatprep.subr.mxu0 0.0
        %1835 = vmatpush1.msra.mxu0 %v1822
        %1836 = vmatprep.subr.mxu0 0.0
        %1837 = vmatpush1.msra.mxu0 %v1823
        %1838 = vmatprep.subr.mxu0 0.0
        %1839 = vmatpush1.msra.mxu0 %v1824
        %1840 = vmatprep.subr.mxu0 0.0
        %1841 = vmatpush1.msra.mxu0 %v1825
        %1842 = vmatprep.subr.mxu0 0.0
        %1843 = vmatpush1.msra.mxu0 %v1826
        %1844 = vmatprep.subr.mxu0 0.0
        %1845 = vmatpush1.msra.mxu0 %v1827
        %1846 = vmatprep.subr.mxu0 0.0
        %1847 = vmatpush1.msra.mxu0 %v1828
        %1848 = vmatprep.subr.mxu0 0.0
        %1849 = vmatpush1.msra.mxu0 0.0
        %1850 = vmatprep.subr.mxu0 0.0
        %1851 = vmatpush1.msra.mxu0 0.0
        %1852 = vmatprep.subr.mxu0 0.0
        %1853 = vmatpush1.msra.mxu0 0.0
        %1854 = vmatprep.subr.mxu0 0.0
        %1855 = vmatpush1.msra.mxu0 0.0
        %1856 = vmatprep.subr.mxu0 0.0
        %1857 = vmatpush1.msra.mxu0 0.0
        %1858 = vmatprep.subr.mxu0 0.0
        %1859 = vmatpush1.msra.mxu0 0.0
        %1860 = vmatprep.subr.mxu0 0.0
        %1861 = vmatpush1.msra.mxu0 0.0
        %1862 = vmatprep.subr.mxu0 0.0
        %1863 = vmatpush1.msra.mxu0 0.0
        %1864 = vmatprep.subr.mxu0 0.0
        %1865 = vmatpush1.msra.mxu0 0.0
        %1866 = vmatprep.subr.mxu0 0.0
        %1867 = vmatpush1.msra.mxu0 0.0
        %1868 = vmatprep.subr.mxu0 0.0
        %1869 = vmatpush1.msra.mxu0 0.0
        %1870 = vmatprep.subr.mxu0 0.0
        %1871 = vmatpush1.msra.mxu0 0.0
        %1872 = vmatprep.subr.mxu0 0.0
        %1873 = vmatpush1.msra.mxu0 0.0
        %1874 = vmatprep.subr.mxu0 0.0
        %1875 = vmatpush1.msra.mxu0 0.0
        %1876 = vmatprep.subr.mxu0 0.0
        %1877 = vmatpush1.msra.mxu0 0.0
        %1878 = vmatprep.subr.mxu0 0.0
        %1879 = vmatpush1.msra.mxu0 0.0
        %1880 = vmatprep.subr.mxu0 0.0
        %1881 = vmatpush1.msra.mxu0 0.0
        %1882 = vmatprep.subr.mxu0 0.0
        %1883 = vmatpush1.msra.mxu0 0.0
        %1884 = vmatprep.subr.mxu0 0.0
        %1885 = vmatpush1.msra.mxu0 0.0
        %1886 = vmatprep.subr.mxu0 0.0
        %1887 = vmatpush1.msra.mxu0 0.0
        %1888 = vmatprep.subr.mxu0 0.0
        %1889 = vmatpush1.msra.mxu0 0.0
        %1890 = vmatprep.subr.mxu0 0.0
        %1891 = vmatpush1.msra.mxu0 0.0
        %1892 = vmatprep.subr.mxu0 0.0
        %1893 = vmatpush1.msra.mxu0 0.0
        %1894 = vmatprep.subr.mxu0 0.0
        %1895 = vmatpush1.msra.mxu0 0.0
        %1896 = vmatprep.mubr.f32.mxu0 0.0
        %1897 = vmatmul.mubr.f32.gmra.mrb[0].mxu0 %v1830
        %v1898 = vpop.f32.mrb[0].mxu0
        %v1899 = vadd.f32 0.0, %v1898
        %v1900 = vpop.f32.mrb[0].mxu0
        %1901 = vdwg.mxu0
        %v1902 = vadd.f32 %v1810, %v1899
        %vm1903 = vcmask 519168
        %v1904 = vsel %vm1903, %v1902, 0.0
        %1905 = vadd.xlane.f32.xlu0 %v1904
        %v1906 = vpop.xlane.xlu0 %1905
        %v1907 = vsel %vm907, %v1906, 0.0
        %v1908 = vrot.slane %v1907, 4
        %v1909 = vadd.f32 %v1907, %v1908
        %v1910 = vrot.slane %v1909, 2
        %v1911 = vadd.f32 %v1909, %v1910
        %v1912 = vrot.slane %v1911, 1
        %v1913 = vadd.f32 %v1911, %v1912
        %v1914 = vmul.f32 %v1913, 0.00390625
        %v1915 = vsub.f32 %v1902, %v1914
        %v1916 = vmul.f32 %v1915, %v1915
        %v1917 = vsel %vm1903, %v1916, 0.0
        %1918 = vadd.xlane.f32.xlu0 %v1917
        %v1919 = vpop.xlane.xlu0 %1918
        %v1920 = vsel %vm907, %v1919, 0.0
        %v1921 = vrot.slane %v1920, 4
        %v1922 = vadd.f32 %v1920, %v1921
        %v1923 = vrot.slane %v1922, 2
        %v1924 = vadd.f32 %v1922, %v1923
        %v1925 = vrot.slane %v1924, 1
        %v1926 = vadd.f32 %v1924, %v1925
        %v1927 = vmul.f32 %v1926, 0.00390625
        %v1928 = vadd.f32 %v1927, 1e-05
        %v1929 = vrsqrt.pop %v1928
        %v1930 = vmul.f32 %v1915, %v1929
        %v1931 = vld [vmem:[%s8] sm:$0x1]
        %v1933 = vlaneseq
        %v1934 = vshrl.u32 %v1933, 7
        %v1935 = vsub.s32 0, %v1934
        %v1936 = vrot.slane %v1931, %v1935
        %v1938 = vmul.f32 %v1930, %v1936
        %v1939 = vld [vmem:[%s9] sm:$0x1]
        %v1941 = vlaneseq
        %v1942 = vshrl.u32 %v1941, 7
        %v1943 = vsub.s32 0, %v1942
        %v1944 = vrot.slane %v1939, %v1943
        %v1946 = vadd.f32 %v1938, %v1944
        %v1947 = vmul.f32 %v1946, 0.01
        %v1948 = vmax.f32 %v1946, %v1947
        %v1949 = vld [vmem:[%s10] sm:$0xf]
        %v1950 = vmul.f32 %v1948, %v1949
        %v1951 = vsel %vm1903, %v1950, 0.0
        %1952 = vadd.xlane.f32.xlu0 %v1951
        %v1953 = vpop.xlane.xlu0 %1952
        %v1954 = vsel %vm907, %v1953, 0.0
        %v1955 = vrot.slane %v1954, 4
        %v1956 = vadd.f32 %v1954, %v1955
        %v1957 = vrot.slane %v1956, 2
        %v1958 = vadd.f32 %v1956, %v1957
        %v1959 = vrot.slane %v1958, 1
        %v1960 = vadd.f32 %v1958, %v1959
        %v1961 = vand.u32 2147483647, %v1960
        %v1962 = vsub.f32 0.0, %v1961
        %v1963 = vmul.f32 %v1962, 1.442695
        %v1964 = vpow.pop %v1963
        %vm1965 = vcmp.ge.f32.partialorder %v1960, 0.0
        %v1966 = vadd.f32 %v1964, 1.0
        %v1967 = vrcp.pop %v1966
        %v1968 = vmul.f32 1.0, %v1967
        %v1969 = vmul.f32 %v1964, %v1967
        %v1970 = vsel %vm1965, %v1968, %v1969
        %1971 = vst [vmem:[%s448] sm:$0xff] %v1970
        %s1972 = sand.u32 %s274, 1
        %s1973 = scalar_lea.sflag [#allocation5], %s1972
        %s1974 = sand.u32 %s274, 1
        %s1975 = smul.addr %s1974, 8
        %s1976 = scalar_lea.vmem [#allocation11], %s1975
        // Predicated region
        $region81: #{tpu_custom_call.1} parent=63 // pred_check
          %p1977 = pneg %p284
        $region82: #{tpu_custom_call.1} parent=63 // pred_check_branch
          %1979 = sbr.rel (%p1977) target = $region84
        $region83: #{tpu_custom_call.1} parent=63 // pred_region
          %s1981 = ssub.s32 128, 128
          %1982 = vsyncadd %s1973, %s1981
          %s1983 = smul.addr %s30, 128
          %s1984 = scalar_lea.hbm %s11, %s1983
          %s1986 = sshll.u32 %s1976, 4
          %s1987 = int_to_ptr.vmem [resolvable:$true] %s1986
          %1989 = dma.vmem_to_hbm [thread:$0]  %s1987, 128, %s1984, %s1973
        $region84: #{tpu_custom_call.1} parent=63 // pred_fallthru
          _
      $region64: #{tpu_custom_call.1} parent=5 // pred_fallthru
        _
      %p1990 = scmp.le.s32.totalorder 2, %s25
      // Predicated region
      $region85: #{tpu_custom_call.1} parent=5 // pred_check
        %p1991 = pneg %p1990
      $region86: #{tpu_custom_call.1} parent=5 // pred_check_branch
        %1993 = sbr.rel (%p1991) target = $region88
      $region87: #{tpu_custom_call.1} parent=5 // pred_region
        %s1994 = ssub.s32 %s25, 2
        // Predicated region
        $region89: #{tpu_custom_call.1} parent=87 // pred_check
          %p1995 = pneg %p290
        $region90: #{tpu_custom_call.1} parent=87 // pred_check_branch
          %1997 = sbr.rel (%p1995) target = $region92
        $region91: #{tpu_custom_call.1} parent=87 // pred_region
          %s1998 = sand.u32 %s275, 1
          %s1999 = scalar_lea.sflag [#allocation5], %s1998
          %s2000 = sand.u32 %s275, 1
          %s2001 = smul.addr %s2000, 8
          %s2002 = scalar_lea.vmem [#allocation11], %s2001
          %2003 = dma.done %s1999, 128
        $region92: #{tpu_custom_call.1} parent=87 // pred_fallthru
          _
      $region88: #{tpu_custom_call.1} parent=5 // pred_fallthru
        _
    $region6: #{tpu_custom_call.1} parent=1 // loop_footer
      %s29 = sadd.s32 1, %s25
    $region7: #{tpu_custom_call.1} parent=1 // loop_footer_branch
      %24 = sbr.rel target = $region3
    $region8: #{tpu_custom_call.1} parent=1 // loop_exit
      _
    %2004 = vsyncpa [#allocation4], 1
    %s2005 = scalar_lea.sflag [#allocation4], 1
    %2006 = vsyncpa %s2005, 1
    %2007 = vsyncpa [#allocation7], 1
    %2008 = vsyncpa [#allocation10], 1
    %2009 = vsyncpa [#allocation5], 1
    %s2010 = scalar_lea.sflag [#allocation5], 1
    %2011 = vsyncpa %s2010, 1

</llo_original>
